<compile_context>
chip_gen: v6e
topology: v6e:2x2x1
jax: 0.10.0
libtpu: 0.0.40
codegen_flags: <defaults>
</compile_context>

<pallas_src>
import functools

import jax
import jax.numpy as jnp
from jax import lax
from jax.experimental import pallas as pl
from jax.experimental.pallas import tpu as pltpu

MATMUL_DTYPE = jnp.bfloat16   # MXU operand dtype (accumulation stays f32)
K = 5                         # conv kernel size (both convs, per the PyTorch module)


# ----------------------------------------------------------------------------
# In-kernel helpers
# ----------------------------------------------------------------------------
def _maxpool2_rows(y):
    """Exact max over row pairs (2i, 2i+1) via one-hot selection matmuls."""
    rows = y.shape[0]
    out_rows = rows // 2
    p = lax.broadcasted_iota(jnp.int32, (out_rows, rows), 0)
    q = lax.broadcasted_iota(jnp.int32, (out_rows, rows), 1)
    sel_e = (q == 2 * p).astype(jnp.float32)
    sel_o = (q == 2 * p + 1).astype(jnp.float32)
    return jnp.maximum(
        jnp.dot(sel_e, y, preferred_element_type=jnp.float32),
        jnp.dot(sel_o, y, preferred_element_type=jnp.float32))


def _maxpool2_cols(y):
    """Exact max over column pairs (2j, 2j+1) via one-hot selection matmuls.

    Activations are laid out as [row, channel*W + col]; because the pooled block
    width is exactly half the un-pooled one, "q == 2p" automatically respects the
    per-channel block structure.
    """
    cols = y.shape[1]
    out_cols = cols // 2
    q = lax.broadcasted_iota(jnp.int32, (cols, out_cols), 0)
    p = lax.broadcasted_iota(jnp.int32, (cols, out_cols), 1)
    sel_e = (q == 2 * p).astype(jnp.float32)
    sel_o = (q == 2 * p + 1).astype(jnp.float32)
    return jnp.maximum(
        jnp.dot(y, sel_e, preferred_element_type=jnp.float32),
        jnp.dot(y, sel_o, preferred_element_type=jnp.float32))


# ----------------------------------------------------------------------------
# The fused forward kernel (one grid step == one batch element)
# ----------------------------------------------------------------------------
def _net_kernel(x_ref, t1_ref, b1_ref, t2_ref, b2_ref,
                wf1_ref, bf1_ref, wf2_ref, bf2_ref, wf3_ref, bf3_ref,
                out_ref,
                r1_s, p1_s, r2_s, p2_s,
                *, c1, c2, h0, w0):
    k = K
    ho1 = h0 - k + 1                     # conv1 output height (24)
    hp1, wp1 = ho1 // 2, (w0 - k + 1) // 2   # pooled conv1 size (12, 12)
    ho2 = hp1 - k + 1                    # conv2 output height (8)
    hp2 = ho2 // 2                       # pooled conv2 height (4)

    # ---- conv1 (5x5 valid) : row-wise im2col -> banded-weight MXU matmul ----
    # R1[i, dy*w0 + x] = input[i + dy, x]
    for dy in range(k):
        r1_s[:, dy * w0:(dy + 1) * w0] = x_ref[0, dy:dy + ho1, :]
    y1 = jnp.dot(r1_s[...].astype(MATMUL_DTYPE), t1_ref[...],
                 preferred_element_type=jnp.float32)           # (ho1, c1*wo1)
    y1 = jnp.maximum(y1 + b1_ref[...], 0.0)                    # bias + ReLU

    # ---- 2x2 max-pool (stride 2), fused in VMEM ----
    p1_s[...] = _maxpool2_cols(_maxpool2_rows(y1))             # (hp1, c1*wp1)

    # ---- conv2 (5x5 valid) over c1 input channels ----
    # R2[i, (c*k + dy)*wp1 + x] = pooled1[c, i + dy, x]
    for c in range(c1):
        for dy in range(k):
            col = (c * k + dy) * wp1
            r2_s[:, col:col + wp1] = p1_s[dy:dy + ho2, c * wp1:(c + 1) * wp1]
    y2 = jnp.dot(r2_s[...].astype(MATMUL_DTYPE), t2_ref[...],
                 preferred_element_type=jnp.float32)           # (ho2, c2*wo2)
    y2 = jnp.maximum(y2 + b2_ref[...], 0.0)

    p2_s[...] = _maxpool2_cols(_maxpool2_rows(y2))             # (hp2, c2*wp2)

    # ---- fc1 + ReLU : the PyTorch flatten is folded into the pre-rearranged
    #      weight wf1[h, c*wp2 + w, n], so we just contract row-by-row. ----
    acc = bf1_ref[...]                                         # (1, f1)
    for h in range(hp2):
        acc = acc + jnp.dot(p2_s[h:h + 1, :].astype(MATMUL_DTYPE), wf1_ref[h],
                            preferred_element_type=jnp.float32)
    a1 = jnp.maximum(acc, 0.0)

    # ---- fc2 + ReLU ----
    a2 = jnp.maximum(
        jnp.dot(a1.astype(MATMUL_DTYPE), wf2_ref[...],
                preferred_element_type=jnp.float32) + bf2_ref[...], 0.0)

    # ---- fc3 (logits) ----
    logits = jnp.dot(a2.astype(MATMUL_DTYPE), wf3_ref[...],
                     preferred_element_type=jnp.float32) + bf3_ref[...]
    out_ref[0] = logits.astype(out_ref.dtype)


# ----------------------------------------------------------------------------
# One-time parameter preprocessing (hoisted out of the forward path)
# ----------------------------------------------------------------------------
def _conv_band_matrix(w, wi):
    """w: (Cout, Cin, k, k) -> T: (Cin*k*wi, Cout*wo) banded weight matrix.

    T[(c*k + dy)*wi + x, co*wo + j] = w[co, c, dy, x - j]  for 0 <= x - j < k.
    With R[i, (c*k + dy)*wi + x] = a[c, i + dy, x] (row-wise im2col),
    (R @ T)[i, co*wo + j] == conv2d(a, w)[co, i, j]  (valid, stride 1).
    """
    cout, cin, k, _ = w.shape
    wo = wi - k + 1
    x = jnp.arange(wi)[:, None]
    j = jnp.arange(wo)[None, :]
    dx = x - j
    valid = ((dx >= 0) & (dx < k)).astype(w.dtype)
    band = w[:, :, :, jnp.clip(dx, 0, k - 1)] * valid[None, None, None]
    band = jnp.transpose(band, (1, 2, 3, 0, 4))        # (cin, k, wi, cout, wo)
    return band.reshape(cin * k * wi, cout * wo)


def prepare_params(params, spec, h0=28, w0=28):
    """Build kernel-ready weights once: banded conv matrices, repeated biases,
    rearranged/pre-transposed fc weights, bf16 casts."""
    c1, c2, f1, f2 = spec
    k = K
    wo1 = w0 - k + 1
    wp1 = wo1 // 2
    wo2 = wp1 - k + 1
    hp2 = ((h0 - k + 1) // 2 - k + 1) // 2
    wp2 = wo2 // 2

    # fc1: PyTorch flat feature index is co*(hp2*wp2) + h*wp2 + w; our pooled
    # activation layout is [h, co*wp2 + w]  ->  wf1[h, co*wp2 + w, n].
    wf1 = params["fc1_w"].reshape(f1, c2, hp2, wp2)
    wf1 = jnp.transpose(wf1, (2, 1, 3, 0)).reshape(hp2, c2 * wp2, f1)

    return {
        "t1": _conv_band_matrix(params["conv1_w"], w0).astype(MATMUL_DTYPE),
        "b1": jnp.repeat(params["conv1_b"], wo1).reshape(1, c1 * wo1).astype(jnp.float32),
        "t2": _conv_band_matrix(params["conv2_w"], wp1).astype(MATMUL_DTYPE),
        "b2": jnp.repeat(params["conv2_b"], wo2).reshape(1, c2 * wo2).astype(jnp.float32),
        "wf1": wf1.astype(MATMUL_DTYPE),
        "bf1": params["fc1_b"].reshape(1, f1).astype(jnp.float32),
        "wf2": params["fc2_w"].T.astype(MATMUL_DTYPE),
        "bf2": params["fc2_b"].reshape(1, f2).astype(jnp.float32),
        "wf3": params["fc3_w"].T.astype(MATMUL_DTYPE),
        "bf3": params["fc3_b"].reshape(1, 10).astype(jnp.float32),
    }


# ----------------------------------------------------------------------------
# Forward pass: ONE pallas_call, grid over batch
# ----------------------------------------------------------------------------
@functools.partial(jax.jit, static_argnames=("spec",))
def net_forward(x, prep, *, spec):
    """x: (B, 1, H, W) NCHW (H = W = 28 for the reference spec). Returns (B, 10)."""
    c1, c2, f1, f2 = spec
    b, cin, h0, w0 = x.shape
    assert cin == 1
    k = K
    ho1, wo1 = h0 - k + 1, w0 - k + 1
    hp1, wp1 = ho1 // 2, wo1 // 2
    ho2, wo2 = hp1 - k + 1, wp1 - k + 1
    hp2, wp2 = ho2 // 2, wo2 // 2
    assert c2 * hp2 * wp2 == f1 * 0 + prep["wf1"].shape[0] * prep["wf1"].shape[1]

    x3 = x.reshape(b, h0, w0).astype(jnp.float32)   # Cin == 1, drop channel dim

    kernel = functools.partial(_net_kernel, c1=c1, c2=c2, h0=h0, w0=w0)

    def full(*shape):
        return pl.BlockSpec(shape, lambda i, _s=shape: (0,) * len(_s))

    in_specs = [
        pl.BlockSpec((1, h0, w0), lambda i: (i, 0, 0)),   # x, one sample per step
        full(1 * k * w0, c1 * wo1),                       # t1 (banded conv1 weights)
        full(1, c1 * wo1),                                # conv1 bias (repeated)
        full(c1 * k * wp1, c2 * wo2),                     # t2 (banded conv2 weights)
        full(1, c2 * wo2),                                # conv2 bias (repeated)
        full(hp2, c2 * wp2, f1),                          # fc1 weights (rearranged)
        full(1, f1),                                      # fc1 bias
        full(f1, f2),                                     # fc2 weights (pre-transposed)
        full(1, f2),                                      # fc2 bias
        full(f2, 10),                                     # fc3 weights (pre-transposed)
        full(1, 10),                                      # fc3 bias
    ]

    out = pl.pallas_call(
        kernel,
        out_shape=jax.ShapeDtypeStruct((b, 1, 10), jnp.float32),
        grid=(b,),
        in_specs=in_specs,
        out_specs=pl.BlockSpec((1, 1, 10), lambda i: (i, 0, 0)),
        scratch_shapes=[
            pltpu.VMEM((ho1, k * w0), jnp.float32),        # conv1 row-im2col
            pltpu.VMEM((hp1, c1 * wp1), jnp.float32),      # pooled conv1 activation
            pltpu.VMEM((ho2, c1 * k * wp1), jnp.float32),  # conv2 row-im2col
            pltpu.VMEM((hp2, c2 * wp2), jnp.float32),      # pooled conv2 activation
        ],
        compiler_params=pltpu.CompilerParams(
            dimension_semantics=("parallel",)),            # batch across TCs on v7x
    )(x3, prep["t1"], prep["b1"], prep["t2"], prep["b2"],
      prep["wf1"], prep["bf1"], prep["wf2"], prep["bf2"],
      prep["wf3"], prep["bf3"])
    return out.reshape(b, 10)


# ----------------------------------------------------------------------------
# Parameters (PyTorch-style init) + pure-JAX reference for verification
# ----------------------------------------------------------------------------
def init_params(key, spec):
    c1, c2, f1, f2 = spec

    def uniform(k_, shape, fan_in):
        bound = 1.0 / jnp.sqrt(jnp.float32(fan_in))
        return jax.random.uniform(k_, shape, jnp.float32, -bound, bound)

    ks = jax.random.split(key, 10)
    return {
        "conv1_w": uniform(ks[0], (c1, 1, 5, 5), 1 * 5 * 5),
        "conv1_b": uniform(ks[1], (c1,), 1 * 5 * 5),
        "conv2_w": uniform(ks[2], (c2, c1, 5, 5), c1 * 5 * 5),
        "conv2_b": uniform(ks[3], (c2,), c1 * 5 * 5),
        "fc1_w": uniform(ks[4], (f1, c2 * 4 * 4), c2 * 4 * 4),
        "fc1_b": uniform(ks[5], (f1,), c2 * 4 * 4),
        "fc2_w": uniform(ks[6], (f2, f1), f1),
        "fc2_b": uniform(ks[7], (f2,), f1),
        "fc3_w": uniform(ks[8], (10, f2), f2),
        "fc3_b": uniform(ks[9], (10,), f2),
    }


def _reference_forward(x, params):
    def conv(a, w, bias):
        y = lax.conv_general_dilated(a, w, (1, 1), "VALID",
                                     dimension_numbers=("NCHW", "OIHW", "NCHW"))
        return y + bias[None, :, None, None]

    a = jax.nn.relu(conv(x, params["conv1_w"], params["conv1_b"]))
    a = lax.reduce_window(a, -jnp.inf, lax.max, (1, 1, 2, 2), (1, 1, 2, 2), "VALID")
    a = jax.nn.relu(conv(a, params["conv2_w"], params["conv2_b"]))
    a = lax.reduce_window(a, -jnp.inf, lax.max, (1, 1, 2, 2), (1, 1, 2, 2), "VALID")
    a = a.reshape(a.shape[0], -1)
    a = jax.nn.relu(a @ params["fc1_w"].T + params["fc1_b"])
    a = jax.nn.relu(a @ params["fc2_w"].T + params["fc2_b"])
    return a @ params["fc3_w"].T + params["fc3_b"]


if __name__ == "__main__":
    spec = (4, 8, 32, 16)          # (conv1_out, conv2_out, fc1_out, fc2_out)
    key = jax.random.PRNGKey(0)
    pkey, xkey = jax.random.split(key)
    params = init_params(pkey, spec)
    prep = prepare_params(params, spec)

    # 28x28 input is required by fc1's fan-in (spec[1] * 4 * 4), as in the module.
    x = jax.random.normal(xkey, (2, 1, 28, 28), jnp.float32)

    out = net_forward(x, prep, spec=spec)
    out = jax.block_until_ready(out)
    assert out.shape == (2, 10), out.shape
    assert bool(jnp.all(jnp.isfinite(out)))

    # Sanity check against a pure-JAX f32 reference (loose tol: MXU operands are bf16).
    ref = _reference_forward(x, params)
    assert bool(jnp.allclose(out, ref, rtol=0.1, atol=0.1))

    print("KERNEL_OK")
</pallas_src>

<mosaic_0001>
module attributes {stable_mosaic.version = 11 : i64} {
  func.func @_net_kernel(%arg0: i32, %arg1: memref<1x28x28xf32, #tpu.memory_space<vmem>>, %arg2: memref<140x96xbf16, #tpu.memory_space<vmem>>, %arg3: memref<1x96xf32, #tpu.memory_space<vmem>>, %arg4: memref<240x64xbf16, #tpu.memory_space<vmem>>, %arg5: memref<1x64xf32, #tpu.memory_space<vmem>>, %arg6: memref<4x32x32xbf16, #tpu.memory_space<vmem>>, %arg7: memref<1x32xf32, #tpu.memory_space<vmem>>, %arg8: memref<32x16xbf16, #tpu.memory_space<vmem>>, %arg9: memref<1x16xf32, #tpu.memory_space<vmem>>, %arg10: memref<16x10xbf16, #tpu.memory_space<vmem>>, %arg11: memref<1x10xf32, #tpu.memory_space<vmem>>, %arg12: memref<1x1x10xf32, #tpu.memory_space<vmem>>, %arg13: memref<24x140xf32, #tpu.memory_space<vmem>>, %arg14: memref<12x48xf32, #tpu.memory_space<vmem>>, %arg15: memref<8x240xf32, #tpu.memory_space<vmem>>, %arg16: memref<4x32xf32, #tpu.memory_space<vmem>>) attributes {dimension_semantics = [#tpu.dimension_semantics<parallel>], iteration_bounds = array<i64: 2>, scalar_prefetch = 0 : i64, scratch_operands = 4 : i64, tpu.core_type = #tpu.core_type<tc>, window_params = [{transform_indices = @transform_0, window_bounds = array<i64: 1, 28, 28>}, {pipeline_mode = #tpu.pipeline_mode<synchronous>, transform_indices = @transform_1, window_bounds = array<i64: 140, 96>}, {pipeline_mode = #tpu.pipeline_mode<synchronous>, transform_indices = @transform_2, window_bounds = array<i64: 1, 96>}, {pipeline_mode = #tpu.pipeline_mode<synchronous>, transform_indices = @transform_3, window_bounds = array<i64: 240, 64>}, {pipeline_mode = #tpu.pipeline_mode<synchronous>, transform_indices = @transform_4, window_bounds = array<i64: 1, 64>}, {pipeline_mode = #tpu.pipeline_mode<synchronous>, transform_indices = @transform_5, window_bounds = array<i64: 4, 32, 32>}, {pipeline_mode = #tpu.pipeline_mode<synchronous>, transform_indices = @transform_6, window_bounds = array<i64: 1, 32>}, {pipeline_mode = #tpu.pipeline_mode<synchronous>, transform_indices = @transform_7, window_bounds = array<i64: 32, 16>}, {pipeline_mode = #tpu.pipeline_mode<synchronous>, transform_indices = @transform_8, window_bounds = array<i64: 1, 16>}, {pipeline_mode = #tpu.pipeline_mode<synchronous>, transform_indices = @transform_9, window_bounds = array<i64: 16, 10>}, {pipeline_mode = #tpu.pipeline_mode<synchronous>, transform_indices = @transform_10, window_bounds = array<i64: 1, 10>}, {transform_indices = @transform_11, window_bounds = array<i64: 1, 1, 10>}]} {
    %c0 = arith.constant 0 : index
    %c0_0 = arith.constant 0 : index
    %c0_1 = arith.constant 0 : index
    %0 = vector.load %arg1[%c0, %c0_0, %c0_1] : memref<1x28x28xf32, #tpu.memory_space<vmem>>, vector<1x24x28xf32>
    %1 = vector.shape_cast %0 : vector<1x24x28xf32> to vector<24x28xf32>
    %c0_2 = arith.constant 0 : index
    %c0_3 = arith.constant 0 : index
    %2 = vector.load %arg13[%c0_2, %c0_3] : memref<24x140xf32, #tpu.memory_space<vmem>>, vector<24x28xf32>
    tpu.vector_store %arg13[%c0_2, %c0_3], %1 {strides = array<i32>} : memref<24x140xf32, #tpu.memory_space<vmem>>, vector<24x28xf32>,
    %c0_4 = arith.constant 0 : index
    %c1 = arith.constant 1 : index
    %c0_5 = arith.constant 0 : index
    %3 = vector.load %arg1[%c0_4, %c1, %c0_5] : memref<1x28x28xf32, #tpu.memory_space<vmem>>, vector<1x24x28xf32>
    %4 = vector.shape_cast %3 : vector<1x24x28xf32> to vector<24x28xf32>
    %c0_6 = arith.constant 0 : index
    %c28 = arith.constant 28 : index
    %5 = vector.load %arg13[%c0_6, %c28] : memref<24x140xf32, #tpu.memory_space<vmem>>, vector<24x28xf32>
    tpu.vector_store %arg13[%c0_6, %c28], %4 {strides = array<i32>} : memref<24x140xf32, #tpu.memory_space<vmem>>, vector<24x28xf32>,
    %c0_7 = arith.constant 0 : index
    %c2 = arith.constant 2 : index
    %c0_8 = arith.constant 0 : index
    %6 = vector.load %arg1[%c0_7, %c2, %c0_8] : memref<1x28x28xf32, #tpu.memory_space<vmem>>, vector<1x24x28xf32>
    %7 = vector.shape_cast %6 : vector<1x24x28xf32> to vector<24x28xf32>
    %c0_9 = arith.constant 0 : index
    %c56 = arith.constant 56 : index
    %8 = vector.load %arg13[%c0_9, %c56] : memref<24x140xf32, #tpu.memory_space<vmem>>, vector<24x28xf32>
    tpu.vector_store %arg13[%c0_9, %c56], %7 {strides = array<i32>} : memref<24x140xf32, #tpu.memory_space<vmem>>, vector<24x28xf32>,
    %c0_10 = arith.constant 0 : index
    %c3 = arith.constant 3 : index
    %c0_11 = arith.constant 0 : index
    %9 = vector.load %arg1[%c0_10, %c3, %c0_11] : memref<1x28x28xf32, #tpu.memory_space<vmem>>, vector<1x24x28xf32>
    %10 = vector.shape_cast %9 : vector<1x24x28xf32> to vector<24x28xf32>
    %c0_12 = arith.constant 0 : index
    %c84 = arith.constant 84 : index
    %11 = vector.load %arg13[%c0_12, %c84] : memref<24x140xf32, #tpu.memory_space<vmem>>, vector<24x28xf32>
    tpu.vector_store %arg13[%c0_12, %c84], %10 {strides = array<i32>} : memref<24x140xf32, #tpu.memory_space<vmem>>, vector<24x28xf32>,
    %c0_13 = arith.constant 0 : index
    %c4 = arith.constant 4 : index
    %c0_14 = arith.constant 0 : index
    %12 = vector.load %arg1[%c0_13, %c4, %c0_14] : memref<1x28x28xf32, #tpu.memory_space<vmem>>, vector<1x24x28xf32>
    %13 = vector.shape_cast %12 : vector<1x24x28xf32> to vector<24x28xf32>
    %c0_15 = arith.constant 0 : index
    %c112 = arith.constant 112 : index
    %14 = vector.load %arg13[%c0_15, %c112] : memref<24x140xf32, #tpu.memory_space<vmem>>, vector<24x28xf32>
    tpu.vector_store %arg13[%c0_15, %c112], %13 {strides = array<i32>} : memref<24x140xf32, #tpu.memory_space<vmem>>, vector<24x28xf32>,
    %c0_16 = arith.constant 0 : index
    %c0_17 = arith.constant 0 : index
    %15 = vector.load %arg13[%c0_16, %c0_17] : memref<24x140xf32, #tpu.memory_space<vmem>>, vector<24x140xf32>
    %16 = arith.truncf %15 : vector<24x140xf32> to vector<24x140xbf16>
    %c0_18 = arith.constant 0 : index
    %c0_19 = arith.constant 0 : index
    %17 = vector.load %arg2[%c0_18, %c0_19] : memref<140x96xbf16, #tpu.memory_space<vmem>>, vector<140x96xbf16>
    %cst = arith.constant dense<0.000000e+00> : vector<24x96xf32>
    %18 = tpu.matmul %16, %17, %cst {dimension_numbers = #tpu.dot_dimension_numbers<[1], [0], [0], [1], [0, 0, 1, 1], [], []>} : vector<24x140xbf16>, vector<140x96xbf16>, vector<24x96xf32> -> vector<24x96xf32>
    %c0_20 = arith.constant 0 : index
    %c0_21 = arith.constant 0 : index
    %19 = vector.load %arg3[%c0_20, %c0_21] : memref<1x96xf32, #tpu.memory_space<vmem>>, vector<1x96xf32>
    %20 = vector.broadcast %19 : vector<1x96xf32> to vector<24x96xf32>
    %21 = arith.addf %18, %20 : vector<24x96xf32>
    %cst_22 = arith.constant 0.000000e+00 : f32
    %22 = vector.broadcast %cst_22 : f32 to vector<24x96xf32>
    %23 = arith.maximumf %21, %22 : vector<24x96xf32>
    %24 = tpu.iota {dimensions = array<i32: 0>} : vector<12x24xi32>
    %25 = tpu.iota {dimensions = array<i32: 1>} : vector<12x24xi32>
    %c2_i32 = arith.constant 2 : i32
    %26 = vector.broadcast %c2_i32 : i32 to vector<12x24xi32>
    %27 = arith.muli %26, %24 : vector<12x24xi32>
    %28 = arith.cmpi eq, %25, %27 : vector<12x24xi32>
    %29 = arith.extui %28 : vector<12x24xi1> to vector<12x24xi32>
    %30 = arith.sitofp %29 : vector<12x24xi32> to vector<12x24xf32>
    %c2_i32_23 = arith.constant 2 : i32
    %31 = vector.broadcast %c2_i32_23 : i32 to vector<12x24xi32>
    %32 = arith.muli %31, %24 : vector<12x24xi32>
    %c1_i32 = arith.constant 1 : i32
    %33 = vector.broadcast %c1_i32 : i32 to vector<12x24xi32>
    %34 = arith.addi %32, %33 : vector<12x24xi32>
    %35 = arith.cmpi eq, %25, %34 : vector<12x24xi32>
    %36 = arith.extui %35 : vector<12x24xi1> to vector<12x24xi32>
    %37 = arith.sitofp %36 : vector<12x24xi32> to vector<12x24xf32>
    %cst_24 = arith.constant dense<0.000000e+00> : vector<12x96xf32>
    %38 = tpu.matmul %30, %23, %cst_24 {dimension_numbers = #tpu.dot_dimension_numbers<[1], [0], [0], [1], [0, 0, 1, 1], [], []>} : vector<12x24xf32>, vector<24x96xf32>, vector<12x96xf32> -> vector<12x96xf32>
    %cst_25 = arith.constant dense<0.000000e+00> : vector<12x96xf32>
    %39 = tpu.matmul %37, %23, %cst_25 {dimension_numbers = #tpu.dot_dimension_numbers<[1], [0], [0], [1], [0, 0, 1, 1], [], []>} : vector<12x24xf32>, vector<24x96xf32>, vector<12x96xf32> -> vector<12x96xf32>
    %40 = arith.maximumf %38, %39 : vector<12x96xf32>
    %41 = tpu.iota {dimensions = array<i32: 0>} : vector<96x48xi32>
    %42 = tpu.iota {dimensions = array<i32: 1>} : vector<96x48xi32>
    %c2_i32_26 = arith.constant 2 : i32
    %43 = vector.broadcast %c2_i32_26 : i32 to vector<96x48xi32>
    %44 = arith.muli %43, %42 : vector<96x48xi32>
    %45 = arith.cmpi eq, %41, %44 : vector<96x48xi32>
    %46 = arith.extui %45 : vector<96x48xi1> to vector<96x48xi32>
    %47 = arith.sitofp %46 : vector<96x48xi32> to vector<96x48xf32>
    %c2_i32_27 = arith.constant 2 : i32
    %48 = vector.broadcast %c2_i32_27 : i32 to vector<96x48xi32>
    %49 = arith.muli %48, %42 : vector<96x48xi32>
    %c1_i32_28 = arith.constant 1 : i32
    %50 = vector.broadcast %c1_i32_28 : i32 to vector<96x48xi32>
    %51 = arith.addi %49, %50 : vector<96x48xi32>
    %52 = arith.cmpi eq, %41, %51 : vector<96x48xi32>
    %53 = arith.extui %52 : vector<96x48xi1> to vector<96x48xi32>
    %54 = arith.sitofp %53 : vector<96x48xi32> to vector<96x48xf32>
    %cst_29 = arith.constant dense<0.000000e+00> : vector<12x48xf32>
    %55 = tpu.matmul %40, %47, %cst_29 {dimension_numbers = #tpu.dot_dimension_numbers<[1], [0], [0], [1], [0, 0, 1, 1], [], []>} : vector<12x96xf32>, vector<96x48xf32>, vector<12x48xf32> -> vector<12x48xf32>
    %cst_30 = arith.constant dense<0.000000e+00> : vector<12x48xf32>
    %56 = tpu.matmul %40, %54, %cst_30 {dimension_numbers = #tpu.dot_dimension_numbers<[1], [0], [0], [1], [0, 0, 1, 1], [], []>} : vector<12x96xf32>, vector<96x48xf32>, vector<12x48xf32> -> vector<12x48xf32>
    %57 = arith.maximumf %55, %56 : vector<12x48xf32>
    %c0_31 = arith.constant 0 : index
    %c0_32 = arith.constant 0 : index
    %58 = vector.load %arg14[%c0_31, %c0_32] : memref<12x48xf32, #tpu.memory_space<vmem>>, vector<12x48xf32>
    tpu.vector_store %arg14[%c0_31, %c0_32], %57 {strides = array<i32>} : memref<12x48xf32, #tpu.memory_space<vmem>>, vector<12x48xf32>,
    %c0_33 = arith.constant 0 : index
    %c0_34 = arith.constant 0 : index
    %59 = vector.load %arg14[%c0_33, %c0_34] : memref<12x48xf32, #tpu.memory_space<vmem>>, vector<8x12xf32>
    %c0_35 = arith.constant 0 : index
    %c0_36 = arith.constant 0 : index
    %60 = vector.load %arg15[%c0_35, %c0_36] : memref<8x240xf32, #tpu.memory_space<vmem>>, vector<8x12xf32>
    tpu.vector_store %arg15[%c0_35, %c0_36], %59 {strides = array<i32>} : memref<8x240xf32, #tpu.memory_space<vmem>>, vector<8x12xf32>,
    %c1_37 = arith.constant 1 : index
    %c0_38 = arith.constant 0 : index
    %61 = vector.load %arg14[%c1_37, %c0_38] : memref<12x48xf32, #tpu.memory_space<vmem>>, vector<8x12xf32>
    %c0_39 = arith.constant 0 : index
    %c12 = arith.constant 12 : index
    %62 = vector.load %arg15[%c0_39, %c12] : memref<8x240xf32, #tpu.memory_space<vmem>>, vector<8x12xf32>
    tpu.vector_store %arg15[%c0_39, %c12], %61 {strides = array<i32>} : memref<8x240xf32, #tpu.memory_space<vmem>>, vector<8x12xf32>,
    %c2_40 = arith.constant 2 : index
    %c0_41 = arith.constant 0 : index
    %63 = vector.load %arg14[%c2_40, %c0_41] : memref<12x48xf32, #tpu.memory_space<vmem>>, vector<8x12xf32>
    %c0_42 = arith.constant 0 : index
    %c24 = arith.constant 24 : index
    %64 = vector.load %arg15[%c0_42, %c24] : memref<8x240xf32, #tpu.memory_space<vmem>>, vector<8x12xf32>
    tpu.vector_store %arg15[%c0_42, %c24], %63 {strides = array<i32>} : memref<8x240xf32, #tpu.memory_space<vmem>>, vector<8x12xf32>,
    %c3_43 = arith.constant 3 : index
    %c0_44 = arith.constant 0 : index
    %65 = vector.load %arg14[%c3_43, %c0_44] : memref<12x48xf32, #tpu.memory_space<vmem>>, vector<8x12xf32>
    %c0_45 = arith.constant 0 : index
    %c36 = arith.constant 36 : index
    %66 = vector.load %arg15[%c0_45, %c36] : memref<8x240xf32, #tpu.memory_space<vmem>>, vector<8x12xf32>
    tpu.vector_store %arg15[%c0_45, %c36], %65 {strides = array<i32>} : memref<8x240xf32, #tpu.memory_space<vmem>>, vector<8x12xf32>,
    %c4_46 = arith.constant 4 : index
    %c0_47 = arith.constant 0 : index
    %67 = vector.load %arg14[%c4_46, %c0_47] : memref<12x48xf32, #tpu.memory_space<vmem>>, vector<8x12xf32>
    %c0_48 = arith.constant 0 : index
    %c48 = arith.constant 48 : index
    %68 = vector.load %arg15[%c0_48, %c48] : memref<8x240xf32, #tpu.memory_space<vmem>>, vector<8x12xf32>
    tpu.vector_store %arg15[%c0_48, %c48], %67 {strides = array<i32>} : memref<8x240xf32, #tpu.memory_space<vmem>>, vector<8x12xf32>,
    %c0_49 = arith.constant 0 : index
    %c12_50 = arith.constant 12 : index
    %69 = vector.load %arg14[%c0_49, %c12_50] : memref<12x48xf32, #tpu.memory_space<vmem>>, vector<8x12xf32>
    %c0_51 = arith.constant 0 : index
    %c60 = arith.constant 60 : index
    %70 = vector.load %arg15[%c0_51, %c60] : memref<8x240xf32, #tpu.memory_space<vmem>>, vector<8x12xf32>
    tpu.vector_store %arg15[%c0_51, %c60], %69 {strides = array<i32>} : memref<8x240xf32, #tpu.memory_space<vmem>>, vector<8x12xf32>,
    %c1_52 = arith.constant 1 : index
    %c12_53 = arith.constant 12 : index
    %71 = vector.load %arg14[%c1_52, %c12_53] : memref<12x48xf32, #tpu.memory_space<vmem>>, vector<8x12xf32>
    %c0_54 = arith.constant 0 : index
    %c72 = arith.constant 72 : index
    %72 = vector.load %arg15[%c0_54, %c72] : memref<8x240xf32, #tpu.memory_space<vmem>>, vector<8x12xf32>
    tpu.vector_store %arg15[%c0_54, %c72], %71 {strides = array<i32>} : memref<8x240xf32, #tpu.memory_space<vmem>>, vector<8x12xf32>,
    %c2_55 = arith.constant 2 : index
    %c12_56 = arith.constant 12 : index
    %73 = vector.load %arg14[%c2_55, %c12_56] : memref<12x48xf32, #tpu.memory_space<vmem>>, vector<8x12xf32>
    %c0_57 = arith.constant 0 : index
    %c84_58 = arith.constant 84 : index
    %74 = vector.load %arg15[%c0_57, %c84_58] : memref<8x240xf32, #tpu.memory_space<vmem>>, vector<8x12xf32>
    tpu.vector_store %arg15[%c0_57, %c84_58], %73 {strides = array<i32>} : memref<8x240xf32, #tpu.memory_space<vmem>>, vector<8x12xf32>,
    %c3_59 = arith.constant 3 : index
    %c12_60 = arith.constant 12 : index
    %75 = vector.load %arg14[%c3_59, %c12_60] : memref<12x48xf32, #tpu.memory_space<vmem>>, vector<8x12xf32>
    %c0_61 = arith.constant 0 : index
    %c96 = arith.constant 96 : index
    %76 = vector.load %arg15[%c0_61, %c96] : memref<8x240xf32, #tpu.memory_space<vmem>>, vector<8x12xf32>
    tpu.vector_store %arg15[%c0_61, %c96], %75 {strides = array<i32>} : memref<8x240xf32, #tpu.memory_space<vmem>>, vector<8x12xf32>,
    %c4_62 = arith.constant 4 : index
    %c12_63 = arith.constant 12 : index
    %77 = vector.load %arg14[%c4_62, %c12_63] : memref<12x48xf32, #tpu.memory_space<vmem>>, vector<8x12xf32>
    %c0_64 = arith.constant 0 : index
    %c108 = arith.constant 108 : index
    %78 = vector.load %arg15[%c0_64, %c108] : memref<8x240xf32, #tpu.memory_space<vmem>>, vector<8x12xf32>
    tpu.vector_store %arg15[%c0_64, %c108], %77 {strides = array<i32>} : memref<8x240xf32, #tpu.memory_space<vmem>>, vector<8x12xf32>,
    %c0_65 = arith.constant 0 : index
    %c24_66 = arith.constant 24 : index
    %79 = vector.load %arg14[%c0_65, %c24_66] : memref<12x48xf32, #tpu.memory_space<vmem>>, vector<8x12xf32>
    %c0_67 = arith.constant 0 : index
    %c120 = arith.constant 120 : index
    %80 = vector.load %arg15[%c0_67, %c120] : memref<8x240xf32, #tpu.memory_space<vmem>>, vector<8x12xf32>
    tpu.vector_store %arg15[%c0_67, %c120], %79 {strides = array<i32>} : memref<8x240xf32, #tpu.memory_space<vmem>>, vector<8x12xf32>,
    %c1_68 = arith.constant 1 : index
    %c24_69 = arith.constant 24 : index
    %81 = vector.load %arg14[%c1_68, %c24_69] : memref<12x48xf32, #tpu.memory_space<vmem>>, vector<8x12xf32>
    %c0_70 = arith.constant 0 : index
    %c132 = arith.constant 132 : index
    %82 = vector.load %arg15[%c0_70, %c132] : memref<8x240xf32, #tpu.memory_space<vmem>>, vector<8x12xf32>
    tpu.vector_store %arg15[%c0_70, %c132], %81 {strides = array<i32>} : memref<8x240xf32, #tpu.memory_space<vmem>>, vector<8x12xf32>,
    %c2_71 = arith.constant 2 : index
    %c24_72 = arith.constant 24 : index
    %83 = vector.load %arg14[%c2_71, %c24_72] : memref<12x48xf32, #tpu.memory_space<vmem>>, vector<8x12xf32>
    %c0_73 = arith.constant 0 : index
    %c144 = arith.constant 144 : index
    %84 = vector.load %arg15[%c0_73, %c144] : memref<8x240xf32, #tpu.memory_space<vmem>>, vector<8x12xf32>
    tpu.vector_store %arg15[%c0_73, %c144], %83 {strides = array<i32>} : memref<8x240xf32, #tpu.memory_space<vmem>>, vector<8x12xf32>,
    %c3_74 = arith.constant 3 : index
    %c24_75 = arith.constant 24 : index
    %85 = vector.load %arg14[%c3_74, %c24_75] : memref<12x48xf32, #tpu.memory_space<vmem>>, vector<8x12xf32>
    %c0_76 = arith.constant 0 : index
    %c156 = arith.constant 156 : index
    %86 = vector.load %arg15[%c0_76, %c156] : memref<8x240xf32, #tpu.memory_space<vmem>>, vector<8x12xf32>
    tpu.vector_store %arg15[%c0_76, %c156], %85 {strides = array<i32>} : memref<8x240xf32, #tpu.memory_space<vmem>>, vector<8x12xf32>,
    %c4_77 = arith.constant 4 : index
    %c24_78 = arith.constant 24 : index
    %87 = vector.load %arg14[%c4_77, %c24_78] : memref<12x48xf32, #tpu.memory_space<vmem>>, vector<8x12xf32>
    %c0_79 = arith.constant 0 : index
    %c168 = arith.constant 168 : index
    %88 = vector.load %arg15[%c0_79, %c168] : memref<8x240xf32, #tpu.memory_space<vmem>>, vector<8x12xf32>
    tpu.vector_store %arg15[%c0_79, %c168], %87 {strides = array<i32>} : memref<8x240xf32, #tpu.memory_space<vmem>>, vector<8x12xf32>,
    %c0_80 = arith.constant 0 : index
    %c36_81 = arith.constant 36 : index
    %89 = vector.load %arg14[%c0_80, %c36_81] : memref<12x48xf32, #tpu.memory_space<vmem>>, vector<8x12xf32>
    %c0_82 = arith.constant 0 : index
    %c180 = arith.constant 180 : index
    %90 = vector.load %arg15[%c0_82, %c180] : memref<8x240xf32, #tpu.memory_space<vmem>>, vector<8x12xf32>
    tpu.vector_store %arg15[%c0_82, %c180], %89 {strides = array<i32>} : memref<8x240xf32, #tpu.memory_space<vmem>>, vector<8x12xf32>,
    %c1_83 = arith.constant 1 : index
    %c36_84 = arith.constant 36 : index
    %91 = vector.load %arg14[%c1_83, %c36_84] : memref<12x48xf32, #tpu.memory_space<vmem>>, vector<8x12xf32>
    %c0_85 = arith.constant 0 : index
    %c192 = arith.constant 192 : index
    %92 = vector.load %arg15[%c0_85, %c192] : memref<8x240xf32, #tpu.memory_space<vmem>>, vector<8x12xf32>
    tpu.vector_store %arg15[%c0_85, %c192], %91 {strides = array<i32>} : memref<8x240xf32, #tpu.memory_space<vmem>>, vector<8x12xf32>,
    %c2_86 = arith.constant 2 : index
    %c36_87 = arith.constant 36 : index
    %93 = vector.load %arg14[%c2_86, %c36_87] : memref<12x48xf32, #tpu.memory_space<vmem>>, vector<8x12xf32>
    %c0_88 = arith.constant 0 : index
    %c204 = arith.constant 204 : index
    %94 = vector.load %arg15[%c0_88, %c204] : memref<8x240xf32, #tpu.memory_space<vmem>>, vector<8x12xf32>
    tpu.vector_store %arg15[%c0_88, %c204], %93 {strides = array<i32>} : memref<8x240xf32, #tpu.memory_space<vmem>>, vector<8x12xf32>,
    %c3_89 = arith.constant 3 : index
    %c36_90 = arith.constant 36 : index
    %95 = vector.load %arg14[%c3_89, %c36_90] : memref<12x48xf32, #tpu.memory_space<vmem>>, vector<8x12xf32>
    %c0_91 = arith.constant 0 : index
    %c216 = arith.constant 216 : index
    %96 = vector.load %arg15[%c0_91, %c216] : memref<8x240xf32, #tpu.memory_space<vmem>>, vector<8x12xf32>
    tpu.vector_store %arg15[%c0_91, %c216], %95 {strides = array<i32>} : memref<8x240xf32, #tpu.memory_space<vmem>>, vector<8x12xf32>,
    %c4_92 = arith.constant 4 : index
    %c36_93 = arith.constant 36 : index
    %97 = vector.load %arg14[%c4_92, %c36_93] : memref<12x48xf32, #tpu.memory_space<vmem>>, vector<8x12xf32>
    %c0_94 = arith.constant 0 : index
    %c228 = arith.constant 228 : index
    %98 = vector.load %arg15[%c0_94, %c228] : memref<8x240xf32, #tpu.memory_space<vmem>>, vector<8x12xf32>
    tpu.vector_store %arg15[%c0_94, %c228], %97 {strides = array<i32>} : memref<8x240xf32, #tpu.memory_space<vmem>>, vector<8x12xf32>,
    %c0_95 = arith.constant 0 : index
    %c0_96 = arith.constant 0 : index
    %99 = vector.load %arg15[%c0_95, %c0_96] : memref<8x240xf32, #tpu.memory_space<vmem>>, vector<8x240xf32>
    %100 = arith.truncf %99 : vector<8x240xf32> to vector<8x240xbf16>
    %c0_97 = arith.constant 0 : index
    %c0_98 = arith.constant 0 : index
    %101 = vector.load %arg4[%c0_97, %c0_98] : memref<240x64xbf16, #tpu.memory_space<vmem>>, vector<240x64xbf16>
    %cst_99 = arith.constant dense<0.000000e+00> : vector<8x64xf32>
    %102 = tpu.matmul %100, %101, %cst_99 {dimension_numbers = #tpu.dot_dimension_numbers<[1], [0], [0], [1], [0, 0, 1, 1], [], []>} : vector<8x240xbf16>, vector<240x64xbf16>, vector<8x64xf32> -> vector<8x64xf32>
    %c0_100 = arith.constant 0 : index
    %c0_101 = arith.constant 0 : index
    %103 = vector.load %arg5[%c0_100, %c0_101] : memref<1x64xf32, #tpu.memory_space<vmem>>, vector<1x64xf32>
    %104 = vector.broadcast %103 : vector<1x64xf32> to vector<8x64xf32>
    %105 = arith.addf %102, %104 : vector<8x64xf32>
    %cst_102 = arith.constant 0.000000e+00 : f32
    %106 = vector.broadcast %cst_102 : f32 to vector<8x64xf32>
    %107 = arith.maximumf %105, %106 : vector<8x64xf32>
    %108 = tpu.iota {dimensions = array<i32: 0>} : vector<4x8xi32>
    %109 = tpu.iota {dimensions = array<i32: 1>} : vector<4x8xi32>
    %c2_i32_103 = arith.constant 2 : i32
    %110 = vector.broadcast %c2_i32_103 : i32 to vector<4x8xi32>
    %111 = arith.muli %110, %108 : vector<4x8xi32>
    %112 = arith.cmpi eq, %109, %111 : vector<4x8xi32>
    %113 = arith.extui %112 : vector<4x8xi1> to vector<4x8xi32>
    %114 = arith.sitofp %113 : vector<4x8xi32> to vector<4x8xf32>
    %c2_i32_104 = arith.constant 2 : i32
    %115 = vector.broadcast %c2_i32_104 : i32 to vector<4x8xi32>
    %116 = arith.muli %115, %108 : vector<4x8xi32>
    %c1_i32_105 = arith.constant 1 : i32
    %117 = vector.broadcast %c1_i32_105 : i32 to vector<4x8xi32>
    %118 = arith.addi %116, %117 : vector<4x8xi32>
    %119 = arith.cmpi eq, %109, %118 : vector<4x8xi32>
    %120 = arith.extui %119 : vector<4x8xi1> to vector<4x8xi32>
    %121 = arith.sitofp %120 : vector<4x8xi32> to vector<4x8xf32>
    %cst_106 = arith.constant dense<0.000000e+00> : vector<4x64xf32>
    %122 = tpu.matmul %114, %107, %cst_106 {dimension_numbers = #tpu.dot_dimension_numbers<[1], [0], [0], [1], [0, 0, 1, 1], [], []>} : vector<4x8xf32>, vector<8x64xf32>, vector<4x64xf32> -> vector<4x64xf32>
    %cst_107 = arith.constant dense<0.000000e+00> : vector<4x64xf32>
    %123 = tpu.matmul %121, %107, %cst_107 {dimension_numbers = #tpu.dot_dimension_numbers<[1], [0], [0], [1], [0, 0, 1, 1], [], []>} : vector<4x8xf32>, vector<8x64xf32>, vector<4x64xf32> -> vector<4x64xf32>
    %124 = arith.maximumf %122, %123 : vector<4x64xf32>
    %125 = tpu.iota {dimensions = array<i32: 0>} : vector<64x32xi32>
    %126 = tpu.iota {dimensions = array<i32: 1>} : vector<64x32xi32>
    %c2_i32_108 = arith.constant 2 : i32
    %127 = vector.broadcast %c2_i32_108 : i32 to vector<64x32xi32>
    %128 = arith.muli %127, %126 : vector<64x32xi32>
    %129 = arith.cmpi eq, %125, %128 : vector<64x32xi32>
    %130 = arith.extui %129 : vector<64x32xi1> to vector<64x32xi32>
    %131 = arith.sitofp %130 : vector<64x32xi32> to vector<64x32xf32>
    %c2_i32_109 = arith.constant 2 : i32
    %132 = vector.broadcast %c2_i32_109 : i32 to vector<64x32xi32>
    %133 = arith.muli %132, %126 : vector<64x32xi32>
    %c1_i32_110 = arith.constant 1 : i32
    %134 = vector.broadcast %c1_i32_110 : i32 to vector<64x32xi32>
    %135 = arith.addi %133, %134 : vector<64x32xi32>
    %136 = arith.cmpi eq, %125, %135 : vector<64x32xi32>
    %137 = arith.extui %136 : vector<64x32xi1> to vector<64x32xi32>
    %138 = arith.sitofp %137 : vector<64x32xi32> to vector<64x32xf32>
    %cst_111 = arith.constant dense<0.000000e+00> : vector<4x32xf32>
    %139 = tpu.matmul %124, %131, %cst_111 {dimension_numbers = #tpu.dot_dimension_numbers<[1], [0], [0], [1], [0, 0, 1, 1], [], []>} : vector<4x64xf32>, vector<64x32xf32>, vector<4x32xf32> -> vector<4x32xf32>
    %cst_112 = arith.constant dense<0.000000e+00> : vector<4x32xf32>
    %140 = tpu.matmul %124, %138, %cst_112 {dimension_numbers = #tpu.dot_dimension_numbers<[1], [0], [0], [1], [0, 0, 1, 1], [], []>} : vector<4x64xf32>, vector<64x32xf32>, vector<4x32xf32> -> vector<4x32xf32>
    %141 = arith.maximumf %139, %140 : vector<4x32xf32>
    %c0_113 = arith.constant 0 : index
    %c0_114 = arith.constant 0 : index
    %142 = vector.load %arg16[%c0_113, %c0_114] : memref<4x32xf32, #tpu.memory_space<vmem>>, vector<4x32xf32>
    tpu.vector_store %arg16[%c0_113, %c0_114], %141 {strides = array<i32>} : memref<4x32xf32, #tpu.memory_space<vmem>>, vector<4x32xf32>,
    %c0_115 = arith.constant 0 : index
    %c0_116 = arith.constant 0 : index
    %143 = vector.load %arg7[%c0_115, %c0_116] : memref<1x32xf32, #tpu.memory_space<vmem>>, vector<1x32xf32>
    %c0_117 = arith.constant 0 : index
    %c0_118 = arith.constant 0 : index
    %144 = vector.load %arg16[%c0_117, %c0_118] : memref<4x32xf32, #tpu.memory_space<vmem>>, vector<1x32xf32>
    %145 = arith.truncf %144 : vector<1x32xf32> to vector<1x32xbf16>
    %c0_119 = arith.constant 0 : index
    %c0_120 = arith.constant 0 : index
    %c0_121 = arith.constant 0 : index
    %146 = vector.load %arg6[%c0_119, %c0_120, %c0_121] : memref<4x32x32xbf16, #tpu.memory_space<vmem>>, vector<1x32x32xbf16>
    %147 = vector.shape_cast %146 : vector<1x32x32xbf16> to vector<32x32xbf16>
    %cst_122 = arith.constant dense<0.000000e+00> : vector<1x32xf32>
    %148 = tpu.matmul %145, %147, %cst_122 {dimension_numbers = #tpu.dot_dimension_numbers<[1], [0], [0], [1], [0, 0, 1, 1], [], []>} : vector<1x32xbf16>, vector<32x32xbf16>, vector<1x32xf32> -> vector<1x32xf32>
    %149 = arith.addf %143, %148 : vector<1x32xf32>
    %c1_123 = arith.constant 1 : index
    %c0_124 = arith.constant 0 : index
    %150 = vector.load %arg16[%c1_123, %c0_124] : memref<4x32xf32, #tpu.memory_space<vmem>>, vector<1x32xf32>
    %151 = arith.truncf %150 : vector<1x32xf32> to vector<1x32xbf16>
    %c1_125 = arith.constant 1 : index
    %c0_126 = arith.constant 0 : index
    %c0_127 = arith.constant 0 : index
    %152 = vector.load %arg6[%c1_125, %c0_126, %c0_127] : memref<4x32x32xbf16, #tpu.memory_space<vmem>>, vector<1x32x32xbf16>
    %153 = vector.shape_cast %152 : vector<1x32x32xbf16> to vector<32x32xbf16>
    %cst_128 = arith.constant dense<0.000000e+00> : vector<1x32xf32>
    %154 = tpu.matmul %151, %153, %cst_128 {dimension_numbers = #tpu.dot_dimension_numbers<[1], [0], [0], [1], [0, 0, 1, 1], [], []>} : vector<1x32xbf16>, vector<32x32xbf16>, vector<1x32xf32> -> vector<1x32xf32>
    %155 = arith.addf %149, %154 : vector<1x32xf32>
    %c2_129 = arith.constant 2 : index
    %c0_130 = arith.constant 0 : index
    %156 = vector.load %arg16[%c2_129, %c0_130] : memref<4x32xf32, #tpu.memory_space<vmem>>, vector<1x32xf32>
    %157 = arith.truncf %156 : vector<1x32xf32> to vector<1x32xbf16>
    %c2_131 = arith.constant 2 : index
    %c0_132 = arith.constant 0 : index
    %c0_133 = arith.constant 0 : index
    %158 = vector.load %arg6[%c2_131, %c0_132, %c0_133] : memref<4x32x32xbf16, #tpu.memory_space<vmem>>, vector<1x32x32xbf16>
    %159 = vector.shape_cast %158 : vector<1x32x32xbf16> to vector<32x32xbf16>
    %cst_134 = arith.constant dense<0.000000e+00> : vector<1x32xf32>
    %160 = tpu.matmul %157, %159, %cst_134 {dimension_numbers = #tpu.dot_dimension_numbers<[1], [0], [0], [1], [0, 0, 1, 1], [], []>} : vector<1x32xbf16>, vector<32x32xbf16>, vector<1x32xf32> -> vector<1x32xf32>
    %161 = arith.addf %155, %160 : vector<1x32xf32>
    %c3_135 = arith.constant 3 : index
    %c0_136 = arith.constant 0 : index
    %162 = vector.load %arg16[%c3_135, %c0_136] : memref<4x32xf32, #tpu.memory_space<vmem>>, vector<1x32xf32>
    %163 = arith.truncf %162 : vector<1x32xf32> to vector<1x32xbf16>
    %c3_137 = arith.constant 3 : index
    %c0_138 = arith.constant 0 : index
    %c0_139 = arith.constant 0 : index
    %164 = vector.load %arg6[%c3_137, %c0_138, %c0_139] : memref<4x32x32xbf16, #tpu.memory_space<vmem>>, vector<1x32x32xbf16>
    %165 = vector.shape_cast %164 : vector<1x32x32xbf16> to vector<32x32xbf16>
    %cst_140 = arith.constant dense<0.000000e+00> : vector<1x32xf32>
    %166 = tpu.matmul %163, %165, %cst_140 {dimension_numbers = #tpu.dot_dimension_numbers<[1], [0], [0], [1], [0, 0, 1, 1], [], []>} : vector<1x32xbf16>, vector<32x32xbf16>, vector<1x32xf32> -> vector<1x32xf32>
    %167 = arith.addf %161, %166 : vector<1x32xf32>
    %cst_141 = arith.constant 0.000000e+00 : f32
    %168 = vector.broadcast %cst_141 : f32 to vector<1x32xf32>
    %169 = arith.maximumf %167, %168 : vector<1x32xf32>
    %170 = arith.truncf %169 : vector<1x32xf32> to vector<1x32xbf16>
    %c0_142 = arith.constant 0 : index
    %c0_143 = arith.constant 0 : index
    %171 = vector.load %arg8[%c0_142, %c0_143] : memref<32x16xbf16, #tpu.memory_space<vmem>>, vector<32x16xbf16>
    %cst_144 = arith.constant dense<0.000000e+00> : vector<1x16xf32>
    %172 = tpu.matmul %170, %171, %cst_144 {dimension_numbers = #tpu.dot_dimension_numbers<[1], [0], [0], [1], [0, 0, 1, 1], [], []>} : vector<1x32xbf16>, vector<32x16xbf16>, vector<1x16xf32> -> vector<1x16xf32>
    %c0_145 = arith.constant 0 : index
    %c0_146 = arith.constant 0 : index
    %173 = vector.load %arg9[%c0_145, %c0_146] : memref<1x16xf32, #tpu.memory_space<vmem>>, vector<1x16xf32>
    %174 = arith.addf %172, %173 : vector<1x16xf32>
    %cst_147 = arith.constant 0.000000e+00 : f32
    %175 = vector.broadcast %cst_147 : f32 to vector<1x16xf32>
    %176 = arith.maximumf %174, %175 : vector<1x16xf32>
    %177 = arith.truncf %176 : vector<1x16xf32> to vector<1x16xbf16>
    %c0_148 = arith.constant 0 : index
    %c0_149 = arith.constant 0 : index
    %178 = vector.load %arg10[%c0_148, %c0_149] : memref<16x10xbf16, #tpu.memory_space<vmem>>, vector<16x10xbf16>
    %cst_150 = arith.constant dense<0.000000e+00> : vector<1x10xf32>
    %179 = tpu.matmul %177, %178, %cst_150 {dimension_numbers = #tpu.dot_dimension_numbers<[1], [0], [0], [1], [0, 0, 1, 1], [], []>} : vector<1x16xbf16>, vector<16x10xbf16>, vector<1x10xf32> -> vector<1x10xf32>
    %c0_151 = arith.constant 0 : index
    %c0_152 = arith.constant 0 : index
    %180 = vector.load %arg11[%c0_151, %c0_152] : memref<1x10xf32, #tpu.memory_space<vmem>>, vector<1x10xf32>
    %181 = arith.addf %179, %180 : vector<1x10xf32>
    %c0_153 = arith.constant 0 : index
    %c0_154 = arith.constant 0 : index
    %c0_155 = arith.constant 0 : index
    %182 = vector.load %arg12[%c0_153, %c0_154, %c0_155] : memref<1x1x10xf32, #tpu.memory_space<vmem>>, vector<1x1x10xf32>
    %183 = vector.shape_cast %182 : vector<1x1x10xf32> to vector<1x10xf32>
    %184 = vector.shape_cast %181 : vector<1x10xf32> to vector<1x1x10xf32>
    tpu.vector_store %arg12[%c0_153, %c0_154, %c0_155], %184 {strides = array<i32>} : memref<1x1x10xf32, #tpu.memory_space<vmem>>, vector<1x1x10xf32>,
    return
  }
  func.func @transform_0(%arg0: i32) -> (i32, i32, i32) {
    %c0_i32 = arith.constant 0 : i32
    %c0_i32_0 = arith.constant 0 : i32
    %c0_i32_1 = arith.constant 0 : i32
    return %arg0, %c0_i32, %c0_i32_0 : i32, i32, i32
  }
  func.func @transform_1(%arg0: i32) -> (i32, i32) {
    %c0_i32 = arith.constant 0 : i32
    %c0_i32_0 = arith.constant 0 : i32
    %c0_i32_1 = arith.constant 0 : i32
    return %c0_i32, %c0_i32_0 : i32, i32
  }
  func.func @transform_2(%arg0: i32) -> (i32, i32) {
    %c0_i32 = arith.constant 0 : i32
    %c0_i32_0 = arith.constant 0 : i32
    %c0_i32_1 = arith.constant 0 : i32
    return %c0_i32, %c0_i32_0 : i32, i32
  }
  func.func @transform_3(%arg0: i32) -> (i32, i32) {
    %c0_i32 = arith.constant 0 : i32
    %c0_i32_0 = arith.constant 0 : i32
    %c0_i32_1 = arith.constant 0 : i32
    return %c0_i32, %c0_i32_0 : i32, i32
  }
  func.func @transform_4(%arg0: i32) -> (i32, i32) {
    %c0_i32 = arith.constant 0 : i32
    %c0_i32_0 = arith.constant 0 : i32
    %c0_i32_1 = arith.constant 0 : i32
    return %c0_i32, %c0_i32_0 : i32, i32
  }
  func.func @transform_5(%arg0: i32) -> (i32, i32, i32) {
    %c0_i32 = arith.constant 0 : i32
    %c0_i32_0 = arith.constant 0 : i32
    %c0_i32_1 = arith.constant 0 : i32
    %c0_i32_2 = arith.constant 0 : i32
    return %c0_i32, %c0_i32_0, %c0_i32_1 : i32, i32, i32
  }
  func.func @transform_6(%arg0: i32) -> (i32, i32) {
    %c0_i32 = arith.constant 0 : i32
    %c0_i32_0 = arith.constant 0 : i32
    %c0_i32_1 = arith.constant 0 : i32
    return %c0_i32, %c0_i32_0 : i32, i32
  }
  func.func @transform_7(%arg0: i32) -> (i32, i32) {
    %c0_i32 = arith.constant 0 : i32
    %c0_i32_0 = arith.constant 0 : i32
    %c0_i32_1 = arith.constant 0 : i32
    return %c0_i32, %c0_i32_0 : i32, i32
  }
  func.func @transform_8(%arg0: i32) -> (i32, i32) {
    %c0_i32 = arith.constant 0 : i32
    %c0_i32_0 = arith.constant 0 : i32
    %c0_i32_1 = arith.constant 0 : i32
    return %c0_i32, %c0_i32_0 : i32, i32
  }
  func.func @transform_9(%arg0: i32) -> (i32, i32) {
    %c0_i32 = arith.constant 0 : i32
    %c0_i32_0 = arith.constant 0 : i32
    %c0_i32_1 = arith.constant 0 : i32
    return %c0_i32, %c0_i32_0 : i32, i32
  }
  func.func @transform_10(%arg0: i32) -> (i32, i32) {
    %c0_i32 = arith.constant 0 : i32
    %c0_i32_0 = arith.constant 0 : i32
    %c0_i32_1 = arith.constant 0 : i32
    return %c0_i32, %c0_i32_0 : i32, i32
  }
  func.func @transform_11(%arg0: i32) -> (i32, i32, i32) {
    %c0_i32 = arith.constant 0 : i32
    %c0_i32_0 = arith.constant 0 : i32
    %c0_i32_1 = arith.constant 0 : i32
    return %arg0, %c0_i32, %c0_i32_0 : i32, i32, i32
  }
}

</mosaic_0001>

<llo_original>
// kernel: net_forward.1
$region0: #{net_forward.1}
  #allocation0 [shape = 'u32[]', space=smem, size = 0x4, offset = 0x4, fixed_abs, tag = 'smem constant byte address 0x4 - core index']
  #allocation1 [shape = 'u32[144,128]{1,0:T(1,128)}', space=vmem, size = 0x12000, scoped, tag = 'internal scratch']
  #allocation2 [shape = 'f32[24,140]{1,0:T(8,128)}', space=vmem, size = 0x6000, scoped, tag = 'scratch operand']
  #allocation3 [shape = 'f32[12,48]{1,0:T(8,128)}', space=vmem, size = 0x2000, scoped, tag = 'scratch operand']
  #allocation4 [shape = 'f32[8,240]{1,0:T(8,128)}', space=vmem, size = 0x2000, scoped, tag = 'scratch operand']
  #allocation5 [shape = 'f32[4,32]{1,0:T(4,128)}', space=vmem, size = 0x800, scoped, tag = 'scratch operand']
  %s0 = inlined_call_operand.vmem [shape: f32[2,28,28], index: 0, kind: input, shape index: {}]
  %s1 = inlined_call_operand.vmem [shape: bf16[140,96], index: 1, kind: input, shape index: {}]
  %s2 = inlined_call_operand.vmem [shape: f32[1,96], index: 2, kind: input, shape index: {}]
  %s3 = inlined_call_operand.vmem [shape: bf16[240,64], index: 3, kind: input, shape index: {}]
  %s4 = inlined_call_operand.vmem [shape: f32[1,64], index: 4, kind: input, shape index: {}]
  %s5 = inlined_call_operand.vmem [shape: bf16[4,32,32], index: 5, kind: input, shape index: {}]
  %s6 = inlined_call_operand.vmem [shape: f32[1,32], index: 6, kind: input, shape index: {}]
  %s7 = inlined_call_operand.vmem [shape: bf16[32,16], index: 7, kind: input, shape index: {}]
  %s8 = inlined_call_operand.vmem [shape: f32[1,16], index: 8, kind: input, shape index: {}]
  %s9 = inlined_call_operand.vmem [shape: bf16[16,10], index: 9, kind: input, shape index: {}]
  %s10 = inlined_call_operand.vmem [shape: f32[1,10], index: 10, kind: input, shape index: {}]
  %s11 = inlined_call_operand.hbm [shape: f32[2,1,10], index: 11, kind: output, shape index: {}]
  %s12 = sld [smem:[#allocation0]]
  $region77: #{net_forward.1} parent=0
    _
  %s14 = ssub.s32 1, %s12
  %s15 = scalar_select 0, %s14, %s12
  $region1: #{net_forward.1} parent=0
    #allocation6 [shape = 'u8[1024]{0}', space=vmem, size = 0x400, scoped, tag = 'output window, operand 0']
    #allocation7 [shape = 's32[2]{0}', space=sflag, size = 0x8, scoped, tag = 'scoped memory for net_forward.1']
    %16 = vsyncpa [#allocation7], 0
    %s17 = scalar_lea.sflag [#allocation7], 1
    %18 = vsyncpa %s17, 0
    loop: start=0, step=1, limit=4
    $region2: #{net_forward.1} parent=1 // loop_pre_header
      _
    $region3: #{net_forward.1} parent=1 // loop_header
      %s20 = sphi 0, %s24
      %p21 = scmp.ge.s32.totalorder %s20, 4
      %s30 = sphi 0, %s32
      %s33 = sphi 0, %s30
      %s34 = sphi 0, %s33
      %s50 = sphi 0, %s34
      %s54 = sphi 0, %s54
      %s56 = sphi 0, %s54
      %s57 = sphi 0, %s56
      %s71 = sphi 0, %s57
      %s75 = sphi 0, %s75
      %s77 = sphi 0, %s75
      %s78 = sphi 0, %s77
      %s92 = sphi 0, %s78
      %s96 = sphi 0, %s96
      %s98 = sphi 0, %s96
      %s99 = sphi 0, %s98
      %s113 = sphi 0, %s99
      %s117 = sphi 0, %s117
      %s119 = sphi 0, %s117
      %s120 = sphi 0, %s119
      %s134 = sphi 0, %s120
      %s138 = sphi 0, %s138
      %s140 = sphi 0, %s138
      %s141 = sphi 0, %s140
      %s155 = sphi 0, %s141
      %s159 = sphi 0, %s159
      %s161 = sphi 0, %s159
      %s162 = sphi 0, %s161
      %s176 = sphi 0, %s162
      %s180 = sphi 0, %s180
      %s182 = sphi 0, %s180
      %s183 = sphi 0, %s182
      %s197 = sphi 0, %s183
      %s201 = sphi 0, %s201
      %s203 = sphi 0, %s201
      %s204 = sphi 0, %s203
      %s218 = sphi 0, %s204
      %s222 = sphi 0, %s222
      %s224 = sphi 0, %s222
      %s225 = sphi 0, %s224
      %s239 = sphi 0, %s225
      %s243 = sphi 0, %s243
      %s245 = sphi 0, %s243
      %s246 = sphi 0, %s245
      %s260 = sphi 0, %s246
      %s266 = sphi 0, %s268
      %s269 = sphi 0, %s266
      %s270 = sphi 0, %s269
      %s286 = sphi 0, %s270
    $region4: #{net_forward.1} parent=1 // loop_header_branch
      %23 = sbr.rel (%p21) target = $region8
    $region5: #{net_forward.1} parent=1 // loop_body
      %s25 = ssub.s32 %s20, 1
      %s26 = ssub.s32 %s20, 2
      %s27 = sadd.s32 %s20, 1
      %s28 = ssub.s32 %s20, %s27
      %p29 = scmp.eq.s32.totalorder %s28, 0
      %s31 = sadd.s32 %s30, 1
      %s32 = scalar_select %p29, %s30, %s31
      %p35 = pneg %p29
      %p36 = scmp.eq.s32.totalorder %s20, 1
      %p37 = por %p35, %p36
      %p38 = scmp.ne.s32.totalorder %s30, %s33
      %p39 = scmp.eq.s32.totalorder %s20, 0
      %p40 = por %p38, %p39
      %p41 = scmp.ne.s32.totalorder %s30, %s33
      %p42 = scmp.eq.s32.totalorder %s25, 1
      %p43 = por %p41, %p42
      %p44 = scmp.ne.s32.totalorder %s33, %s34
      %p45 = scmp.eq.s32.totalorder %s25, 0
      %p46 = por %p44, %p45
      %p47 = scmp.ne.s32.totalorder %s33, %s34
      %p48 = scmp.eq.s32.totalorder %s26, 1
      %p49 = por %p47, %p48
      %p51 = scmp.ne.s32.totalorder %s34, %s50
      %p52 = scmp.eq.s32.totalorder %s26, 0
      %p53 = por %p51, %p52
      %s55 = sadd.s32 %s54, 1
      %p58 = scmp.eq.s32.totalorder %s20, 1
      %p59 = scmp.ne.s32.totalorder %s54, %s56
      %p60 = scmp.eq.s32.totalorder %s20, 0
      %p61 = por %p59, %p60
      %p62 = scmp.ne.s32.totalorder %s54, %s56
      %p63 = scmp.eq.s32.totalorder %s25, 1
      %p64 = por %p62, %p63
      %p65 = scmp.ne.s32.totalorder %s56, %s57
      %p66 = scmp.eq.s32.totalorder %s25, 0
      %p67 = por %p65, %p66
      %p68 = scmp.ne.s32.totalorder %s56, %s57
      %p69 = scmp.eq.s32.totalorder %s26, 1
      %p70 = por %p68, %p69
      %p72 = scmp.ne.s32.totalorder %s57, %s71
      %p73 = scmp.eq.s32.totalorder %s26, 0
      %p74 = por %p72, %p73
      %s76 = sadd.s32 %s75, 1
      %p79 = scmp.eq.s32.totalorder %s20, 1
      %p80 = scmp.ne.s32.totalorder %s75, %s77
      %p81 = scmp.eq.s32.totalorder %s20, 0
      %p82 = por %p80, %p81
      %p83 = scmp.ne.s32.totalorder %s75, %s77
      %p84 = scmp.eq.s32.totalorder %s25, 1
      %p85 = por %p83, %p84
      %p86 = scmp.ne.s32.totalorder %s77, %s78
      %p87 = scmp.eq.s32.totalorder %s25, 0
      %p88 = por %p86, %p87
      %p89 = scmp.ne.s32.totalorder %s77, %s78
      %p90 = scmp.eq.s32.totalorder %s26, 1
      %p91 = por %p89, %p90
      %p93 = scmp.ne.s32.totalorder %s78, %s92
      %p94 = scmp.eq.s32.totalorder %s26, 0
      %p95 = por %p93, %p94
      %s97 = sadd.s32 %s96, 1
      %p100 = scmp.eq.s32.totalorder %s20, 1
      %p101 = scmp.ne.s32.totalorder %s96, %s98
      %p102 = scmp.eq.s32.totalorder %s20, 0
      %p103 = por %p101, %p102
      %p104 = scmp.ne.s32.totalorder %s96, %s98
      %p105 = scmp.eq.s32.totalorder %s25, 1
      %p106 = por %p104, %p105
      %p107 = scmp.ne.s32.totalorder %s98, %s99
      %p108 = scmp.eq.s32.totalorder %s25, 0
      %p109 = por %p107, %p108
      %p110 = scmp.ne.s32.totalorder %s98, %s99
      %p111 = scmp.eq.s32.totalorder %s26, 1
      %p112 = por %p110, %p111
      %p114 = scmp.ne.s32.totalorder %s99, %s113
      %p115 = scmp.eq.s32.totalorder %s26, 0
      %p116 = por %p114, %p115
      %s118 = sadd.s32 %s117, 1
      %p121 = scmp.eq.s32.totalorder %s20, 1
      %p122 = scmp.ne.s32.totalorder %s117, %s119
      %p123 = scmp.eq.s32.totalorder %s20, 0
      %p124 = por %p122, %p123
      %p125 = scmp.ne.s32.totalorder %s117, %s119
      %p126 = scmp.eq.s32.totalorder %s25, 1
      %p127 = por %p125, %p126
      %p128 = scmp.ne.s32.totalorder %s119, %s120
      %p129 = scmp.eq.s32.totalorder %s25, 0
      %p130 = por %p128, %p129
      %p131 = scmp.ne.s32.totalorder %s119, %s120
      %p132 = scmp.eq.s32.totalorder %s26, 1
      %p133 = por %p131, %p132
      %p135 = scmp.ne.s32.totalorder %s120, %s134
      %p136 = scmp.eq.s32.totalorder %s26, 0
      %p137 = por %p135, %p136
      %s139 = sadd.s32 %s138, 1
      %p142 = scmp.eq.s32.totalorder %s20, 1
      %p143 = scmp.ne.s32.totalorder %s138, %s140
      %p144 = scmp.eq.s32.totalorder %s20, 0
      %p145 = por %p143, %p144
      %p146 = scmp.ne.s32.totalorder %s138, %s140
      %p147 = scmp.eq.s32.totalorder %s25, 1
      %p148 = por %p146, %p147
      %p149 = scmp.ne.s32.totalorder %s140, %s141
      %p150 = scmp.eq.s32.totalorder %s25, 0
      %p151 = por %p149, %p150
      %p152 = scmp.ne.s32.totalorder %s140, %s141
      %p153 = scmp.eq.s32.totalorder %s26, 1
      %p154 = por %p152, %p153
      %p156 = scmp.ne.s32.totalorder %s141, %s155
      %p157 = scmp.eq.s32.totalorder %s26, 0
      %p158 = por %p156, %p157
      %s160 = sadd.s32 %s159, 1
      %p163 = scmp.eq.s32.totalorder %s20, 1
      %p164 = scmp.ne.s32.totalorder %s159, %s161
      %p165 = scmp.eq.s32.totalorder %s20, 0
      %p166 = por %p164, %p165
      %p167 = scmp.ne.s32.totalorder %s159, %s161
      %p168 = scmp.eq.s32.totalorder %s25, 1
      %p169 = por %p167, %p168
      %p170 = scmp.ne.s32.totalorder %s161, %s162
      %p171 = scmp.eq.s32.totalorder %s25, 0
      %p172 = por %p170, %p171
      %p173 = scmp.ne.s32.totalorder %s161, %s162
      %p174 = scmp.eq.s32.totalorder %s26, 1
      %p175 = por %p173, %p174
      %p177 = scmp.ne.s32.totalorder %s162, %s176
      %p178 = scmp.eq.s32.totalorder %s26, 0
      %p179 = por %p177, %p178
      %s181 = sadd.s32 %s180, 1
      %p184 = scmp.eq.s32.totalorder %s20, 1
      %p185 = scmp.ne.s32.totalorder %s180, %s182
      %p186 = scmp.eq.s32.totalorder %s20, 0
      %p187 = por %p185, %p186
      %p188 = scmp.ne.s32.totalorder %s180, %s182
      %p189 = scmp.eq.s32.totalorder %s25, 1
      %p190 = por %p188, %p189
      %p191 = scmp.ne.s32.totalorder %s182, %s183
      %p192 = scmp.eq.s32.totalorder %s25, 0
      %p193 = por %p191, %p192
      %p194 = scmp.ne.s32.totalorder %s182, %s183
      %p195 = scmp.eq.s32.totalorder %s26, 1
      %p196 = por %p194, %p195
      %p198 = scmp.ne.s32.totalorder %s183, %s197
      %p199 = scmp.eq.s32.totalorder %s26, 0
      %p200 = por %p198, %p199
      %s202 = sadd.s32 %s201, 1
      %p205 = scmp.eq.s32.totalorder %s20, 1
      %p206 = scmp.ne.s32.totalorder %s201, %s203
      %p207 = scmp.eq.s32.totalorder %s20, 0
      %p208 = por %p206, %p207
      %p209 = scmp.ne.s32.totalorder %s201, %s203
      %p210 = scmp.eq.s32.totalorder %s25, 1
      %p211 = por %p209, %p210
      %p212 = scmp.ne.s32.totalorder %s203, %s204
      %p213 = scmp.eq.s32.totalorder %s25, 0
      %p214 = por %p212, %p213
      %p215 = scmp.ne.s32.totalorder %s203, %s204
      %p216 = scmp.eq.s32.totalorder %s26, 1
      %p217 = por %p215, %p216
      %p219 = scmp.ne.s32.totalorder %s204, %s218
      %p220 = scmp.eq.s32.totalorder %s26, 0
      %p221 = por %p219, %p220
      %s223 = sadd.s32 %s222, 1
      %p226 = scmp.eq.s32.totalorder %s20, 1
      %p227 = scmp.ne.s32.totalorder %s222, %s224
      %p228 = scmp.eq.s32.totalorder %s20, 0
      %p229 = por %p227, %p228
      %p230 = scmp.ne.s32.totalorder %s222, %s224
      %p231 = scmp.eq.s32.totalorder %s25, 1
      %p232 = por %p230, %p231
      %p233 = scmp.ne.s32.totalorder %s224, %s225
      %p234 = scmp.eq.s32.totalorder %s25, 0
      %p235 = por %p233, %p234
      %p236 = scmp.ne.s32.totalorder %s224, %s225
      %p237 = scmp.eq.s32.totalorder %s26, 1
      %p238 = por %p236, %p237
      %p240 = scmp.ne.s32.totalorder %s225, %s239
      %p241 = scmp.eq.s32.totalorder %s26, 0
      %p242 = por %p240, %p241
      %s244 = sadd.s32 %s243, 1
      %p247 = scmp.eq.s32.totalorder %s20, 1
      %p248 = scmp.ne.s32.totalorder %s243, %s245
      %p249 = scmp.eq.s32.totalorder %s20, 0
      %p250 = por %p248, %p249
      %p251 = scmp.ne.s32.totalorder %s243, %s245
      %p252 = scmp.eq.s32.totalorder %s25, 1
      %p253 = por %p251, %p252
      %p254 = scmp.ne.s32.totalorder %s245, %s246
      %p255 = scmp.eq.s32.totalorder %s25, 0
      %p256 = por %p254, %p255
      %p257 = scmp.ne.s32.totalorder %s245, %s246
      %p258 = scmp.eq.s32.totalorder %s26, 1
      %p259 = por %p257, %p258
      %p261 = scmp.ne.s32.totalorder %s246, %s260
      %p262 = scmp.eq.s32.totalorder %s26, 0
      %p263 = por %p261, %p262
      %s264 = ssub.s32 %s20, %s27
      %p265 = scmp.eq.s32.totalorder %s264, 0
      %s267 = sadd.s32 %s266, 1
      %s268 = scalar_select %p265, %s266, %s267
      %p271 = pneg %p265
      %p272 = scmp.eq.s32.totalorder %s20, 1
      %p273 = por %p271, %p272
      %p274 = scmp.ne.s32.totalorder %s266, %s269
      %p275 = scmp.eq.s32.totalorder %s20, 0
      %p276 = por %p274, %p275
      %p277 = scmp.ne.s32.totalorder %s266, %s269
      %p278 = scmp.eq.s32.totalorder %s25, 1
      %p279 = por %p277, %p278
      %p280 = scmp.ne.s32.totalorder %s269, %s270
      %p281 = scmp.eq.s32.totalorder %s25, 0
      %p282 = por %p280, %p281
      %p283 = scmp.ne.s32.totalorder %s269, %s270
      %p284 = scmp.eq.s32.totalorder %s26, 1
      %p285 = por %p283, %p284
      %p287 = scmp.ne.s32.totalorder %s270, %s286
      %p288 = scmp.eq.s32.totalorder %s26, 0
      %p289 = por %p287, %p288
      %p290 = scmp.le.s32.totalorder 1, %s20
      %p291 = scmp.lt.s32.totalorder %s20, 3
      %p292 = pnand %p290, %p291
      %p293 = pneg %p292
      // Predicated region
      $region9: #{net_forward.1} parent=5 // pred_check
        _
      $region10: #{net_forward.1} parent=5 // pred_check_branch
        %295 = sbr.rel (%p292) target = $region12
      $region11: #{net_forward.1} parent=5 // pred_region
        %s296 = ssub.s32 %s20, 1
        // Predicated region
        $region13: #{net_forward.1} parent=11 // pred_check
          %p297 = pneg %p67
        $region14: #{net_forward.1} parent=11 // pred_check_branch
          %299 = sbr.rel (%p297) target = $region16
        $region15: #{net_forward.1} parent=11 // pred_region
          _
        $region16: #{net_forward.1} parent=11 // pred_fallthru
          _
        // Predicated region
        $region17: #{net_forward.1} parent=11 // pred_check
          %p300 = pneg %p88
        $region18: #{net_forward.1} parent=11 // pred_check_branch
          %302 = sbr.rel (%p300) target = $region20
        $region19: #{net_forward.1} parent=11 // pred_region
          _
        $region20: #{net_forward.1} parent=11 // pred_fallthru
          _
        // Predicated region
        $region21: #{net_forward.1} parent=11 // pred_check
          %p303 = pneg %p109
        $region22: #{net_forward.1} parent=11 // pred_check_branch
          %305 = sbr.rel (%p303) target = $region24
        $region23: #{net_forward.1} parent=11 // pred_region
          _
        $region24: #{net_forward.1} parent=11 // pred_fallthru
          _
        // Predicated region
        $region25: #{net_forward.1} parent=11 // pred_check
          %p306 = pneg %p130
        $region26: #{net_forward.1} parent=11 // pred_check_branch
          %308 = sbr.rel (%p306) target = $region28
        $region27: #{net_forward.1} parent=11 // pred_region
          _
        $region28: #{net_forward.1} parent=11 // pred_fallthru
          _
        // Predicated region
        $region29: #{net_forward.1} parent=11 // pred_check
          %p309 = pneg %p151
        $region30: #{net_forward.1} parent=11 // pred_check_branch
          %311 = sbr.rel (%p309) target = $region32
        $region31: #{net_forward.1} parent=11 // pred_region
          _
        $region32: #{net_forward.1} parent=11 // pred_fallthru
          _
        // Predicated region
        $region33: #{net_forward.1} parent=11 // pred_check
          %p312 = pneg %p172
        $region34: #{net_forward.1} parent=11 // pred_check_branch
          %314 = sbr.rel (%p312) target = $region36
        $region35: #{net_forward.1} parent=11 // pred_region
          _
        $region36: #{net_forward.1} parent=11 // pred_fallthru
          _
        // Predicated region
        $region37: #{net_forward.1} parent=11 // pred_check
          %p315 = pneg %p193
        $region38: #{net_forward.1} parent=11 // pred_check_branch
          %317 = sbr.rel (%p315) target = $region40
        $region39: #{net_forward.1} parent=11 // pred_region
          _
        $region40: #{net_forward.1} parent=11 // pred_fallthru
          _
        // Predicated region
        $region41: #{net_forward.1} parent=11 // pred_check
          %p318 = pneg %p214
        $region42: #{net_forward.1} parent=11 // pred_check_branch
          %320 = sbr.rel (%p318) target = $region44
        $region43: #{net_forward.1} parent=11 // pred_region
          _
        $region44: #{net_forward.1} parent=11 // pred_fallthru
          _
        // Predicated region
        $region45: #{net_forward.1} parent=11 // pred_check
          %p321 = pneg %p235
        $region46: #{net_forward.1} parent=11 // pred_check_branch
          %323 = sbr.rel (%p321) target = $region48
        $region47: #{net_forward.1} parent=11 // pred_region
          _
        $region48: #{net_forward.1} parent=11 // pred_fallthru
          _
        // Predicated region
        $region49: #{net_forward.1} parent=11 // pred_check
          %p324 = pneg %p256
        $region50: #{net_forward.1} parent=11 // pred_check_branch
          %326 = sbr.rel (%p324) target = $region52
        $region51: #{net_forward.1} parent=11 // pred_region
          _
        $region52: #{net_forward.1} parent=11 // pred_fallthru
          _
      $region12: #{net_forward.1} parent=5 // pred_fallthru
        _
      %p327 = scmp.lt.s32.totalorder %s20, 2
      // Predicated region
      $region53: #{net_forward.1} parent=5 // pred_check
        %p328 = pneg %p327
      $region54: #{net_forward.1} parent=5 // pred_check_branch
        %330 = sbr.rel (%p328) target = $region56
      $region55: #{net_forward.1} parent=5 // pred_region
        // Predicated region
        $region57: #{net_forward.1} parent=55 // pred_check
          %p331 = pneg %p40
        $region58: #{net_forward.1} parent=55 // pred_check_branch
          %333 = sbr.rel (%p331) target = $region60
        $region59: #{net_forward.1} parent=55 // pred_region
          %p334 = scmp.lt.s32.totalorder %s20, 1
          %s335 = scalar_select %p334, %s20, 1
          %s336 = smul.addr %s335, 4
          %s337 = smul.addr %s336, 8
          %s338 = scalar_lea.vmem %s0, %s337
        $region60: #{net_forward.1} parent=55 // pred_fallthru
          _
      $region56: #{net_forward.1} parent=5 // pred_fallthru
        _
      %p339 = scmp.le.s32.totalorder 1, %s20
      %p340 = scmp.lt.s32.totalorder %s20, 3
      %p341 = pnand %p339, %p340
      %p342 = pneg %p341
      // Predicated region
      $region61: #{net_forward.1} parent=5 // pred_check
        _
      $region62: #{net_forward.1} parent=5 // pred_check_branch
        %344 = sbr.rel (%p341) target = $region64
      $region63: #{net_forward.1} parent=5 // pred_region
        %s345 = ssub.s32 %s20, 1
        %p346 = scmp.lt.s32.totalorder %s25, 1
        %s347 = scalar_select %p346, %s25, 1
        %s348 = smul.addr %s347, 4
        %s349 = smul.addr %s348, 8
        %s350 = scalar_lea.vmem %s0, %s349
        %p351 = pneg %p46
        %p352 = pneg %p43
        %p353 = pneg %p67
        %p354 = pneg %p64
        %p355 = pneg %p88
        %p356 = pneg %p85
        %p357 = pneg %p109
        %p358 = pneg %p106
        %p359 = pneg %p130
        %p360 = pneg %p127
        %p361 = pneg %p151
        %p362 = pneg %p148
        %p363 = pneg %p172
        %p364 = pneg %p169
        %p365 = pneg %p193
        %p366 = pneg %p190
        %p367 = pneg %p214
        %p368 = pneg %p211
        %p369 = pneg %p235
        %p370 = pneg %p232
        %p371 = pneg %p256
        %p372 = pneg %p253
        %p373 = pneg %p282
        %p374 = pneg %p279
        %s375 = sand.u32 %s269, 1
        %s376 = scalar_lea.sflag [#allocation7], %s375
        %s377 = sand.u32 %s269, 1
        %s378 = scalar_lea.vmem [#allocation6], %s377
        %p379 = scmp.lt.s32.totalorder %s25, 1
        %s380 = scalar_select %p379, %s25, 1
        %s381 = smul.addr %s380, 4
        %s382 = smul.addr %s381, 8
        %s383 = scalar_lea.vmem %s0, %s382
        %v385 = vld [vmem:[%s383] sm:$0xff]
        %v386 = vld [vmem:[%s383 + $0x8] sm:$0xff]
        %v387 = vld [vmem:[%s383 + $0x10] sm:$0xff]
        %vm388 = vcmask 228352
        %389 = vst.msk [vmem:[#allocation2] sm:$0xff] %vm388, %v385
        %390 = vst.msk [vmem:[#allocation2 + $0x10] sm:$0xff] %vm388, %v386
        %391 = vst.msk [vmem:[#allocation2 + $0x20] sm:$0xff] %vm388, %v387
        %v392 = vld [vmem:[%s383 + $0x1] sm:$0xff]
        %v393 = vld [vmem:[%s383 + $0x9] sm:$0xff]
        %v394 = vld [vmem:[%s383 + $0x11] sm:$0xff]
        %398 = vrot.lane.b32.xlu0 %v392, 28
        %v399 = vpop.permute.xlu0 %398
        %400 = vrot.lane.b32.xlu0 %v393, 28
        %v401 = vpop.permute.xlu0 %400
        %402 = vrot.lane.b32.xlu0 %v394, 28
        %v403 = vpop.permute.xlu0 %402
        %vm407 = vcmask 457952
        %408 = vst.msk [vmem:[#allocation2] sm:$0xff] %vm407, %v399
        %409 = vst.msk [vmem:[#allocation2 + $0x10] sm:$0xff] %vm407, %v401
        %410 = vst.msk [vmem:[#allocation2 + $0x20] sm:$0xff] %vm407, %v403
        %v411 = vld [vmem:[%s383 + $0x2] sm:$0xff]
        %v412 = vld [vmem:[%s383 + $0xa] sm:$0xff]
        %v413 = vld [vmem:[%s383 + $0x12] sm:$0xff]
        %417 = vrot.lane.b32.xlu0 %v411, 56
        %v418 = vpop.permute.xlu0 %417
        %419 = vrot.lane.b32.xlu0 %v412, 56
        %v420 = vpop.permute.xlu0 %419
        %421 = vrot.lane.b32.xlu0 %v413, 56
        %v422 = vpop.permute.xlu0 %421
        %vm426 = vcmask 687552
        %427 = vst.msk [vmem:[#allocation2] sm:$0xff] %vm426, %v418
        %428 = vst.msk [vmem:[#allocation2 + $0x10] sm:$0xff] %vm426, %v420
        %429 = vst.msk [vmem:[#allocation2 + $0x20] sm:$0xff] %vm426, %v422
        %v430 = vld [vmem:[%s383 + $0x3] sm:$0xff]
        %v431 = vld [vmem:[%s383 + $0xb] sm:$0xff]
        %v432 = vld [vmem:[%s383 + $0x13] sm:$0xff]
        %436 = vrot.lane.b32.xlu0 %v430, 84
        %v437 = vpop.permute.xlu0 %436
        %438 = vrot.lane.b32.xlu0 %v431, 84
        %v439 = vpop.permute.xlu0 %438
        %440 = vrot.lane.b32.xlu0 %v432, 84
        %v441 = vpop.permute.xlu0 %440
        %vm445 = vcmask 917152
        %446 = vst.msk [vmem:[#allocation2] sm:$0xff] %vm445, %v437
        %447 = vst.msk [vmem:[#allocation2 + $0x10] sm:$0xff] %vm445, %v439
        %448 = vst.msk [vmem:[#allocation2 + $0x20] sm:$0xff] %vm445, %v441
        %v449 = vld [vmem:[%s383 + $0x4] sm:$0xff]
        %v450 = vld [vmem:[%s383 + $0xc] sm:$0xff]
        %v451 = vld [vmem:[%s383 + $0x14] sm:$0xff]
        %455 = vrot.lane.b32.xlu0 %v449, 112
        %v456 = vpop.permute.xlu0 %455
        %457 = vrot.lane.b32.xlu0 %v450, 112
        %v458 = vpop.permute.xlu0 %457
        %459 = vrot.lane.b32.xlu0 %v451, 112
        %v460 = vpop.permute.xlu0 %459
        %vm464 = vcmask 1048448
        %465 = vst.msk [vmem:[#allocation2] sm:$0xff] %vm464, %v456
        %vm466 = vcmask 97280
        %467 = vst.msk [vmem:[#allocation2 + $0x8] sm:$0xff] %vm466, %v456
        %468 = vst.msk [vmem:[#allocation2 + $0x10] sm:$0xff] %vm464, %v458
        %469 = vst.msk [vmem:[#allocation2 + $0x18] sm:$0xff] %vm466, %v458
        %470 = vst.msk [vmem:[#allocation2 + $0x20] sm:$0xff] %vm464, %v460
        %471 = vst.msk [vmem:[#allocation2 + $0x28] sm:$0xff] %vm466, %v460
        %v472 = vld [vmem:[#allocation2] sm:$0xff]
        %v473 = vld [vmem:[#allocation2 + $0x8] sm:$0xff]
        %v474 = vld [vmem:[#allocation2 + $0x10] sm:$0xff]
        %v475 = vld [vmem:[#allocation2 + $0x18] sm:$0xff]
        %v476 = vld [vmem:[#allocation2 + $0x20] sm:$0xff]
        %v477 = vld [vmem:[#allocation2 + $0x28] sm:$0xff]
        %v478 = vpack.c.bf16 %v474, %v472
        %v479 = vpack.c.bf16 %v475, %v473
        %v480 = vpack.c.bf16 %v476, %v476
        %v481 = vpack.c.bf16 %v477, %v477
        %v482 = vld [vmem:[%s1] sm:$0xf]
        %v483 = vld [vmem:[%s1 + $0x4] sm:$0xf]
        %v484 = vld [vmem:[%s1 + $0x8] sm:$0xf]
        %v485 = vld [vmem:[%s1 + $0xc] sm:$0xf]
        %v486 = vld [vmem:[%s1 + $0x10] sm:$0xf]
        %v487 = vld [vmem:[%s1 + $0x14] sm:$0xf]
        %v488 = vld [vmem:[%s1 + $0x18] sm:$0xf]
        %v489 = vld [vmem:[%s1 + $0x1c] sm:$0xf]
        %v490 = vld [vmem:[%s1 + $0x20] sm:$0xf]
        %v491 = vld [vmem:[%s1 + $0x24] sm:$0xf]
        %v492 = vld [vmem:[%s1 + $0x28] sm:$0xf]
        %v493 = vld [vmem:[%s1 + $0x2c] sm:$0xf]
        %v494 = vld [vmem:[%s1 + $0x30] sm:$0xf]
        %v495 = vld [vmem:[%s1 + $0x34] sm:$0xf]
        %v496 = vld [vmem:[%s1 + $0x38] sm:$0xf]
        %v497 = vld [vmem:[%s1 + $0x3c] sm:$0xf]
        %v498 = vld [vmem:[%s1 + $0x40] sm:$0xf]
        %v499 = vld [vmem:[%s1 + $0x44] sm:$0x3]
        %v500 = vld [vmem:[%s2] sm:$0x1]
        %v502 = vlaneseq
        %v503 = vshrl.u32 %v502, 7
        %v504 = vsub.s32 0, %v503
        %v505 = vrot.slane %v500, %v504
        %v525 = vunpack.c.l.b16 %v482
        %v526 = vunpack.c.l.b16 %v483
        %v527 = vunpack.c.l.b16 %v484
        %v528 = vunpack.c.l.b16 %v485
        %v529 = vunpack.c.l.b16 %v486
        %v530 = vunpack.c.l.b16 %v487
        %v531 = vunpack.c.l.b16 %v488
        %v532 = vunpack.c.l.b16 %v489
        %v533 = vunpack.c.l.b16 %v490
        %v534 = vunpack.c.l.b16 %v491
        %v535 = vunpack.c.l.b16 %v492
        %v536 = vunpack.c.l.b16 %v493
        %v537 = vunpack.c.l.b16 %v494
        %v538 = vunpack.c.l.b16 %v495
        %v539 = vunpack.c.l.b16 %v496
        %v540 = vunpack.c.l.b16 %v497
        %v541 = vunpack.c.l.b16 %v498
        %v542 = vunpack.c.l.b16 %v499
        %v543 = vpack.c.b16 %v526, %v525
        %v544 = vpack.c.b16 %v528, %v527
        %v545 = vpack.c.b16 %v530, %v529
        %v546 = vpack.c.b16 %v532, %v531
        %v547 = vpack.c.b16 %v534, %v533
        %v548 = vpack.c.b16 %v536, %v535
        %v549 = vpack.c.b16 %v538, %v537
        %v550 = vpack.c.b16 %v540, %v539
        %v551 = vpack.c.b16 %v542, %v541
        %v561 = vsel %vm466, %v479, 0
        %v564 = vsel %vm466, %v481, 0
        %vm566 = vcmask 1045504
        %v568 = vsel %vm566, %v551, 0
        %570 = vmatprep.subr.bf16.mxu0 0
        %571 = vmatpush1.bf16.msra.mxu0 %v550
        %572 = vmatprep.subr.bf16.mxu0 0
        %573 = vmatpush1.bf16.msra.mxu0 %v549
        %574 = vmatprep.subr.bf16.mxu0 0
        %575 = vmatpush1.bf16.msra.mxu0 %v548
        %576 = vmatprep.subr.bf16.mxu0 0
        %577 = vmatpush1.bf16.msra.mxu0 %v547
        %578 = vmatprep.subr.bf16.mxu0 0
        %579 = vmatpush1.bf16.msra.mxu0 %v546
        %580 = vmatprep.subr.bf16.mxu0 0
        %581 = vmatpush1.bf16.msra.mxu0 %v545
        %582 = vmatprep.subr.bf16.mxu0 0
        %583 = vmatpush1.bf16.msra.mxu0 %v544
        %584 = vmatprep.subr.bf16.mxu0 0
        %585 = vmatpush1.bf16.msra.mxu0 %v543
        %586 = vmatprep.subr.bf16.mxu0 0
        %587 = vmatpush2.bf16.msra.mxu0 0
        %588 = vmatprep.subr.bf16.mxu0 0
        %589 = vmatpush2.bf16.msra.mxu0 0
        %590 = vmatprep.subr.bf16.mxu0 0
        %591 = vmatpush2.bf16.msra.mxu0 0
        %592 = vmatprep.subr.bf16.mxu0 0
        %593 = vmatpush2.bf16.msra.mxu0 0
        %594 = vmatprep.subr.bf16.mxu0 0
        %595 = vmatpush2.bf16.msra.mxu0 0
        %596 = vmatprep.subr.bf16.mxu0 0
        %597 = vmatpush2.bf16.msra.mxu0 0
        %598 = vmatprep.subr.bf16.mxu0 0
        %599 = vmatpush2.bf16.msra.mxu0 0
        %600 = vmatprep.subr.bf16.mxu0 0
        %601 = vmatpush2.bf16.msra.mxu0 %v568
        %602 = vmatprep.mubr.bf16.mxu0 %v561
        %603 = vmatmul.mubr.bf16.gmra.mxu0 %v478
        %v604 = vpop.f32.mrf.mxu0
        %v605 = vadd.f32 %v505, %v604
        %v606 = vpop.f32.mrf.mxu0
        %v607 = vpop.f32.mrf.mxu0
        %v608 = vadd.f32 %v505, %v607
        %v609 = vpop.f32.mrf.mxu0
        %610 = vmatprep.mubr.bf16.mxu0 %v564
        %611 = vmatmul.mubr.bf16.gmra.mxu0 %v480
        %v612 = vpop.f32.mrf.mxu0
        %v613 = vadd.f32 %v505, %v612
        %v614 = vpop.f32.mrf.mxu0
        %v615 = vpop.f32.mrf.mxu0
        %v616 = vpop.f32.mrf.mxu0
        %617 = vdwg.mxu0
        %v618 = vmax.f32 %v605, 0.0
        %v619 = vmax.f32 %v608, 0.0
        %v620 = vmax.f32 %v613, 0.0
        %v621 = vlaneseq
        %v622 = vshrl.u32 %v621, 7
        %v623 = vadd.s32 %v622, 8
        %v624 = vlaneseq
        %v625 = vand.u32 %v624, 127
        %v626 = vmul.u32 %v622, 2
        %v627 = vmul.u32 %v623, 2
        %vm628 = vcmp.eq.s32.totalorder %v625, %v626
        %vm629 = vcmp.eq.s32.totalorder %v625, %v627
        %v630 = vsel %vm628, 1, 0
        %v631 = vsel %vm629, 1, 0
        %v632 = vcvt.s32.f32 %v630
        %v633 = vcvt.s32.f32 %v631
        %v634 = vadd.s32 %v626, 1
        %v635 = vadd.s32 %v627, 1
        %vm636 = vcmp.eq.s32.totalorder %v625, %v634
        %vm637 = vcmp.eq.s32.totalorder %v625, %v635
        %v638 = vsel %vm636, 1, 0
        %v639 = vsel %vm637, 1, 0
        %v640 = vcvt.s32.f32 %v638
        %v641 = vcvt.s32.f32 %v639
        %vm642 = vcmask 195584
        %v644 = vsel %vm642, %v632, 0
        %v647 = vsel %vm642, %v633, 0
        %649 = vmatprep.subr.mxu0 0.0
        %650 = vmatpush1.msra.mxu0 0.0
        %651 = vmatprep.subr.mxu0 0.0
        %652 = vmatpush1.msra.mxu0 0.0
        %653 = vmatprep.subr.mxu0 0.0
        %654 = vmatpush1.msra.mxu0 0.0
        %655 = vmatprep.subr.mxu0 0.0
        %656 = vmatpush1.msra.mxu0 0.0
        %657 = vmatprep.subr.mxu0 0.0
        %658 = vmatpush1.msra.mxu0 0.0
        %659 = vmatprep.subr.mxu0 0.0
        %660 = vmatpush1.msra.mxu0 0.0
        %661 = vmatprep.subr.mxu0 0.0
        %662 = vmatpush1.msra.mxu0 0.0
        %663 = vmatprep.subr.mxu0 0.0
        %664 = vmatpush1.msra.mxu0 0.0
        %665 = vmatprep.subr.mxu0 0.0
        %666 = vmatpush1.msra.mxu0 0.0
        %667 = vmatprep.subr.mxu0 0.0
        %668 = vmatpush1.msra.mxu0 0.0
        %669 = vmatprep.subr.mxu0 0.0
        %670 = vmatpush1.msra.mxu0 0.0
        %671 = vmatprep.subr.mxu0 0.0
        %672 = vmatpush1.msra.mxu0 0.0
        %673 = vmatprep.subr.mxu0 0.0
        %674 = vmatpush1.msra.mxu0 0.0
        %675 = vmatprep.subr.mxu0 0.0
        %676 = vmatpush1.msra.mxu0 %v620
        %677 = vmatprep.subr.mxu0 0.0
        %678 = vmatpush1.msra.mxu0 %v619
        %679 = vmatprep.subr.mxu0 0.0
        %680 = vmatpush1.msra.mxu0 %v618
        %681 = vmatprep.subr.mxu0 0.0
        %682 = vmatpush2.msra.mxu0 0.0
        %683 = vmatprep.subr.mxu0 0.0
        %684 = vmatpush2.msra.mxu0 0.0
        %685 = vmatprep.subr.mxu0 0.0
        %686 = vmatpush2.msra.mxu0 0.0
        %687 = vmatprep.subr.mxu0 0.0
        %688 = vmatpush2.msra.mxu0 0.0
        %689 = vmatprep.subr.mxu0 0.0
        %690 = vmatpush2.msra.mxu0 0.0
        %691 = vmatprep.subr.mxu0 0.0
        %692 = vmatpush2.msra.mxu0 0.0
        %693 = vmatprep.subr.mxu0 0.0
        %694 = vmatpush2.msra.mxu0 0.0
        %695 = vmatprep.subr.mxu0 0.0
        %696 = vmatpush2.msra.mxu0 0.0
        %697 = vmatprep.subr.mxu0 0.0
        %698 = vmatpush2.msra.mxu0 0.0
        %699 = vmatprep.subr.mxu0 0.0
        %700 = vmatpush2.msra.mxu0 0.0
        %701 = vmatprep.subr.mxu0 0.0
        %702 = vmatpush2.msra.mxu0 0.0
        %703 = vmatprep.subr.mxu0 0.0
        %704 = vmatpush2.msra.mxu0 0.0
        %705 = vmatprep.subr.mxu0 0.0
        %706 = vmatpush2.msra.mxu0 0.0
        %707 = vmatprep.subr.mxu0 0.0
        %708 = vmatpush2.msra.mxu0 0.0
        %709 = vmatprep.subr.mxu0 0.0
        %710 = vmatpush2.msra.mxu0 0.0
        %711 = vmatprep.subr.mxu0 0.0
        %712 = vmatpush2.msra.mxu0 0.0
        %713 = vmatprep.mubr.f32.mxu0 0.0
        %714 = vmatmul.mubr.f32.gmra.mxu0 %v644
        %v715 = vpop.f32.mrf.mxu0
        %v716 = vadd.f32 0.0, %v715
        %v717 = vpop.f32.mrf.mxu0
        %718 = vmatprep.mubr.f32.mxu0 0.0
        %719 = vmatmul.mubr.f32.gmra.mxu0 %v647
        %v720 = vpop.f32.mrf.mxu0
        %v721 = vadd.f32 0.0, %v720
        %v722 = vpop.f32.mrf.mxu0
        %723 = vdwg.mxu0
        %v725 = vsel %vm642, %v640, 0
        %v728 = vsel %vm642, %v641, 0
        %730 = vmatprep.subr.mxu0 0.0
        %731 = vmatpush1.msra.mxu0 0.0
        %732 = vmatprep.subr.mxu0 0.0
        %733 = vmatpush1.msra.mxu0 0.0
        %734 = vmatprep.subr.mxu0 0.0
        %735 = vmatpush1.msra.mxu0 0.0
        %736 = vmatprep.subr.mxu0 0.0
        %737 = vmatpush1.msra.mxu0 0.0
        %738 = vmatprep.subr.mxu0 0.0
        %739 = vmatpush1.msra.mxu0 0.0
        %740 = vmatprep.subr.mxu0 0.0
        %741 = vmatpush1.msra.mxu0 0.0
        %742 = vmatprep.subr.mxu0 0.0
        %743 = vmatpush1.msra.mxu0 0.0
        %744 = vmatprep.subr.mxu0 0.0
        %745 = vmatpush1.msra.mxu0 0.0
        %746 = vmatprep.subr.mxu0 0.0
        %747 = vmatpush1.msra.mxu0 0.0
        %748 = vmatprep.subr.mxu0 0.0
        %749 = vmatpush1.msra.mxu0 0.0
        %750 = vmatprep.subr.mxu0 0.0
        %751 = vmatpush1.msra.mxu0 0.0
        %752 = vmatprep.subr.mxu0 0.0
        %753 = vmatpush1.msra.mxu0 0.0
        %754 = vmatprep.subr.mxu0 0.0
        %755 = vmatpush1.msra.mxu0 0.0
        %756 = vmatprep.subr.mxu0 0.0
        %757 = vmatpush1.msra.mxu0 %v620
        %758 = vmatprep.subr.mxu0 0.0
        %759 = vmatpush1.msra.mxu0 %v619
        %760 = vmatprep.subr.mxu0 0.0
        %761 = vmatpush1.msra.mxu0 %v618
        %762 = vmatprep.subr.mxu0 0.0
        %763 = vmatpush2.msra.mxu0 0.0
        %764 = vmatprep.subr.mxu0 0.0
        %765 = vmatpush2.msra.mxu0 0.0
        %766 = vmatprep.subr.mxu0 0.0
        %767 = vmatpush2.msra.mxu0 0.0
        %768 = vmatprep.subr.mxu0 0.0
        %769 = vmatpush2.msra.mxu0 0.0
        %770 = vmatprep.subr.mxu0 0.0
        %771 = vmatpush2.msra.mxu0 0.0
        %772 = vmatprep.subr.mxu0 0.0
        %773 = vmatpush2.msra.mxu0 0.0
        %774 = vmatprep.subr.mxu0 0.0
        %775 = vmatpush2.msra.mxu0 0.0
        %776 = vmatprep.subr.mxu0 0.0
        %777 = vmatpush2.msra.mxu0 0.0
        %778 = vmatprep.subr.mxu0 0.0
        %779 = vmatpush2.msra.mxu0 0.0
        %780 = vmatprep.subr.mxu0 0.0
        %781 = vmatpush2.msra.mxu0 0.0
        %782 = vmatprep.subr.mxu0 0.0
        %783 = vmatpush2.msra.mxu0 0.0
        %784 = vmatprep.subr.mxu0 0.0
        %785 = vmatpush2.msra.mxu0 0.0
        %786 = vmatprep.subr.mxu0 0.0
        %787 = vmatpush2.msra.mxu0 0.0
        %788 = vmatprep.subr.mxu0 0.0
        %789 = vmatpush2.msra.mxu0 0.0
        %790 = vmatprep.subr.mxu0 0.0
        %791 = vmatpush2.msra.mxu0 0.0
        %792 = vmatprep.subr.mxu0 0.0
        %793 = vmatpush2.msra.mxu0 0.0
        %794 = vmatprep.mubr.f32.mxu0 0.0
        %795 = vmatmul.mubr.f32.gmra.mxu0 %v725
        %v796 = vpop.f32.mrf.mxu0
        %v797 = vadd.f32 0.0, %v796
        %v798 = vpop.f32.mrf.mxu0
        %799 = vmatprep.mubr.f32.mxu0 0.0
        %800 = vmatmul.mubr.f32.gmra.mxu0 %v728
        %v801 = vpop.f32.mrf.mxu0
        %v802 = vadd.f32 0.0, %v801
        %v803 = vpop.f32.mrf.mxu0
        %804 = vdwg.mxu0
        %v805 = vmax.f32 %v716, %v797
        %v806 = vmax.f32 %v721, %v802
        %v807 = vadd.s32 %v622, 16
        %v808 = vadd.s32 %v622, 24
        %v809 = vadd.s32 %v622, 32
        %v810 = vadd.s32 %v622, 40
        %v811 = vadd.s32 %v622, 48
        %v812 = vadd.s32 %v622, 56
        %v813 = vadd.s32 %v622, 64
        %v814 = vadd.s32 %v622, 72
        %v815 = vadd.s32 %v622, 80
        %v816 = vadd.s32 %v622, 88
        %v817 = vmul.u32 %v625, 2
        %vm818 = vcmp.eq.s32.totalorder %v622, %v817
        %vm819 = vcmp.eq.s32.totalorder %v623, %v817
        %vm820 = vcmp.eq.s32.totalorder %v807, %v817
        %vm821 = vcmp.eq.s32.totalorder %v808, %v817
        %vm822 = vcmp.eq.s32.totalorder %v809, %v817
        %vm823 = vcmp.eq.s32.totalorder %v810, %v817
        %vm824 = vcmp.eq.s32.totalorder %v811, %v817
        %vm825 = vcmp.eq.s32.totalorder %v812, %v817
        %vm826 = vcmp.eq.s32.totalorder %v813, %v817
        %vm827 = vcmp.eq.s32.totalorder %v814, %v817
        %vm828 = vcmp.eq.s32.totalorder %v815, %v817
        %vm829 = vcmp.eq.s32.totalorder %v816, %v817
        %v830 = vsel %vm818, 1, 0
        %v831 = vsel %vm819, 1, 0
        %v832 = vsel %vm820, 1, 0
        %v833 = vsel %vm821, 1, 0
        %v834 = vsel %vm822, 1, 0
        %v835 = vsel %vm823, 1, 0
        %v836 = vsel %vm824, 1, 0
        %v837 = vsel %vm825, 1, 0
        %v838 = vsel %vm826, 1, 0
        %v839 = vsel %vm827, 1, 0
        %v840 = vsel %vm828, 1, 0
        %v841 = vsel %vm829, 1, 0
        %v842 = vcvt.s32.f32 %v830
        %v843 = vcvt.s32.f32 %v831
        %v844 = vcvt.s32.f32 %v832
        %v845 = vcvt.s32.f32 %v833
        %v846 = vcvt.s32.f32 %v834
        %v847 = vcvt.s32.f32 %v835
        %v848 = vcvt.s32.f32 %v836
        %v849 = vcvt.s32.f32 %v837
        %v850 = vcvt.s32.f32 %v838
        %v851 = vcvt.s32.f32 %v839
        %v852 = vcvt.s32.f32 %v840
        %v853 = vcvt.s32.f32 %v841
        %v854 = vadd.s32 %v817, 1
        %vm855 = vcmp.eq.s32.totalorder %v622, %v854
        %vm856 = vcmp.eq.s32.totalorder %v623, %v854
        %vm857 = vcmp.eq.s32.totalorder %v807, %v854
        %vm858 = vcmp.eq.s32.totalorder %v808, %v854
        %vm859 = vcmp.eq.s32.totalorder %v809, %v854
        %vm860 = vcmp.eq.s32.totalorder %v810, %v854
        %vm861 = vcmp.eq.s32.totalorder %v811, %v854
        %vm862 = vcmp.eq.s32.totalorder %v812, %v854
        %vm863 = vcmp.eq.s32.totalorder %v813, %v854
        %vm864 = vcmp.eq.s32.totalorder %v814, %v854
        %vm865 = vcmp.eq.s32.totalorder %v815, %v854
        %vm866 = vcmp.eq.s32.totalorder %v816, %v854
        %v867 = vsel %vm855, 1, 0
        %v868 = vsel %vm856, 1, 0
        %v869 = vsel %vm857, 1, 0
        %v870 = vsel %vm858, 1, 0
        %v871 = vsel %vm859, 1, 0
        %v872 = vsel %vm860, 1, 0
        %v873 = vsel %vm861, 1, 0
        %v874 = vsel %vm862, 1, 0
        %v875 = vsel %vm863, 1, 0
        %v876 = vsel %vm864, 1, 0
        %v877 = vsel %vm865, 1, 0
        %v878 = vsel %vm866, 1, 0
        %v879 = vcvt.s32.f32 %v867
        %v880 = vcvt.s32.f32 %v868
        %v881 = vcvt.s32.f32 %v869
        %v882 = vcvt.s32.f32 %v870
        %v883 = vcvt.s32.f32 %v871
        %v884 = vcvt.s32.f32 %v872
        %v885 = vcvt.s32.f32 %v873
        %v886 = vcvt.s32.f32 %v874
        %v887 = vcvt.s32.f32 %v875
        %v888 = vcvt.s32.f32 %v876
        %v889 = vcvt.s32.f32 %v877
        %v890 = vcvt.s32.f32 %v878
        %vm891 = vcmask 785408
        %v893 = vsel %vm891, %v805, 0
        %v896 = vsel %vm891, %v806, 0
        %898 = vmatprep.subr.mxu0 0.0
        %899 = vmatpush1.msra.mxu0 0.0
        %900 = vmatprep.subr.mxu0 0.0
        %901 = vmatpush1.msra.mxu0 0.0
        %902 = vmatprep.subr.mxu0 0.0
        %903 = vmatpush1.msra.mxu0 0.0
        %904 = vmatprep.subr.mxu0 0.0
        %905 = vmatpush1.msra.mxu0 0.0
        %906 = vmatprep.subr.mxu0 0.0
        %907 = vmatpush1.msra.mxu0 %v853
        %908 = vmatprep.subr.mxu0 0.0
        %909 = vmatpush1.msra.mxu0 %v852
        %910 = vmatprep.subr.mxu0 0.0
        %911 = vmatpush1.msra.mxu0 %v851
        %912 = vmatprep.subr.mxu0 0.0
        %913 = vmatpush1.msra.mxu0 %v850
        %914 = vmatprep.subr.mxu0 0.0
        %915 = vmatpush1.msra.mxu0 %v849
        %916 = vmatprep.subr.mxu0 0.0
        %917 = vmatpush1.msra.mxu0 %v848
        %918 = vmatprep.subr.mxu0 0.0
        %919 = vmatpush1.msra.mxu0 %v847
        %920 = vmatprep.subr.mxu0 0.0
        %921 = vmatpush1.msra.mxu0 %v846
        %922 = vmatprep.subr.mxu0 0.0
        %923 = vmatpush1.msra.mxu0 %v845
        %924 = vmatprep.subr.mxu0 0.0
        %925 = vmatpush1.msra.mxu0 %v844
        %926 = vmatprep.subr.mxu0 0.0
        %927 = vmatpush1.msra.mxu0 %v843
        %928 = vmatprep.subr.mxu0 0.0
        %929 = vmatpush1.msra.mxu0 %v842
        %930 = vmatprep.subr.mxu0 0.0
        %931 = vmatpush2.msra.mxu0 0.0
        %932 = vmatprep.subr.mxu0 0.0
        %933 = vmatpush2.msra.mxu0 0.0
        %934 = vmatprep.subr.mxu0 0.0
        %935 = vmatpush2.msra.mxu0 0.0
        %936 = vmatprep.subr.mxu0 0.0
        %937 = vmatpush2.msra.mxu0 0.0
        %938 = vmatprep.subr.mxu0 0.0
        %939 = vmatpush2.msra.mxu0 0.0
        %940 = vmatprep.subr.mxu0 0.0
        %941 = vmatpush2.msra.mxu0 0.0
        %942 = vmatprep.subr.mxu0 0.0
        %943 = vmatpush2.msra.mxu0 0.0
        %944 = vmatprep.subr.mxu0 0.0
        %945 = vmatpush2.msra.mxu0 0.0
        %946 = vmatprep.subr.mxu0 0.0
        %947 = vmatpush2.msra.mxu0 0.0
        %948 = vmatprep.subr.mxu0 0.0
        %949 = vmatpush2.msra.mxu0 0.0
        %950 = vmatprep.subr.mxu0 0.0
        %951 = vmatpush2.msra.mxu0 0.0
        %952 = vmatprep.subr.mxu0 0.0
        %953 = vmatpush2.msra.mxu0 0.0
        %954 = vmatprep.subr.mxu0 0.0
        %955 = vmatpush2.msra.mxu0 0.0
        %956 = vmatprep.subr.mxu0 0.0
        %957 = vmatpush2.msra.mxu0 0.0
        %958 = vmatprep.subr.mxu0 0.0
        %959 = vmatpush2.msra.mxu0 0.0
        %960 = vmatprep.subr.mxu0 0.0
        %961 = vmatpush2.msra.mxu0 0.0
        %962 = vmatprep.mubr.f32.mxu0 0.0
        %963 = vmatmul.mubr.f32.gmra.mxu0 %v893
        %v964 = vpop.f32.mrf.mxu0
        %v965 = vadd.f32 0.0, %v964
        %v966 = vpop.f32.mrf.mxu0
        %967 = vmatprep.mubr.f32.mxu0 0.0
        %968 = vmatmul.mubr.f32.gmra.mxu0 %v896
        %v969 = vpop.f32.mrf.mxu0
        %v970 = vadd.f32 0.0, %v969
        %v971 = vpop.f32.mrf.mxu0
        %972 = vdwg.mxu0
        %973 = vmatprep.subr.mxu0 0.0
        %974 = vmatpush1.msra.mxu0 0.0
        %975 = vmatprep.subr.mxu0 0.0
        %976 = vmatpush1.msra.mxu0 0.0
        %977 = vmatprep.subr.mxu0 0.0
        %978 = vmatpush1.msra.mxu0 0.0
        %979 = vmatprep.subr.mxu0 0.0
        %980 = vmatpush1.msra.mxu0 0.0
        %981 = vmatprep.subr.mxu0 0.0
        %982 = vmatpush1.msra.mxu0 %v890
        %983 = vmatprep.subr.mxu0 0.0
        %984 = vmatpush1.msra.mxu0 %v889
        %985 = vmatprep.subr.mxu0 0.0
        %986 = vmatpush1.msra.mxu0 %v888
        %987 = vmatprep.subr.mxu0 0.0
        %988 = vmatpush1.msra.mxu0 %v887
        %989 = vmatprep.subr.mxu0 0.0
        %990 = vmatpush1.msra.mxu0 %v886
        %991 = vmatprep.subr.mxu0 0.0
        %992 = vmatpush1.msra.mxu0 %v885
        %993 = vmatprep.subr.mxu0 0.0
        %994 = vmatpush1.msra.mxu0 %v884
        %995 = vmatprep.subr.mxu0 0.0
        %996 = vmatpush1.msra.mxu0 %v883
        %997 = vmatprep.subr.mxu0 0.0
        %998 = vmatpush1.msra.mxu0 %v882
        %999 = vmatprep.subr.mxu0 0.0
        %1000 = vmatpush1.msra.mxu0 %v881
        %1001 = vmatprep.subr.mxu0 0.0
        %1002 = vmatpush1.msra.mxu0 %v880
        %1003 = vmatprep.subr.mxu0 0.0
        %1004 = vmatpush1.msra.mxu0 %v879
        %1005 = vmatprep.subr.mxu0 0.0
        %1006 = vmatpush2.msra.mxu0 0.0
        %1007 = vmatprep.subr.mxu0 0.0
        %1008 = vmatpush2.msra.mxu0 0.0
        %1009 = vmatprep.subr.mxu0 0.0
        %1010 = vmatpush2.msra.mxu0 0.0
        %1011 = vmatprep.subr.mxu0 0.0
        %1012 = vmatpush2.msra.mxu0 0.0
        %1013 = vmatprep.subr.mxu0 0.0
        %1014 = vmatpush2.msra.mxu0 0.0
        %1015 = vmatprep.subr.mxu0 0.0
        %1016 = vmatpush2.msra.mxu0 0.0
        %1017 = vmatprep.subr.mxu0 0.0
        %1018 = vmatpush2.msra.mxu0 0.0
        %1019 = vmatprep.subr.mxu0 0.0
        %1020 = vmatpush2.msra.mxu0 0.0
        %1021 = vmatprep.subr.mxu0 0.0
        %1022 = vmatpush2.msra.mxu0 0.0
        %1023 = vmatprep.subr.mxu0 0.0
        %1024 = vmatpush2.msra.mxu0 0.0
        %1025 = vmatprep.subr.mxu0 0.0
        %1026 = vmatpush2.msra.mxu0 0.0
        %1027 = vmatprep.subr.mxu0 0.0
        %1028 = vmatpush2.msra.mxu0 0.0
        %1029 = vmatprep.subr.mxu0 0.0
        %1030 = vmatpush2.msra.mxu0 0.0
        %1031 = vmatprep.subr.mxu0 0.0
        %1032 = vmatpush2.msra.mxu0 0.0
        %1033 = vmatprep.subr.mxu0 0.0
        %1034 = vmatpush2.msra.mxu0 0.0
        %1035 = vmatprep.subr.mxu0 0.0
        %1036 = vmatpush2.msra.mxu0 0.0
        %1037 = vmatprep.mubr.f32.mxu0 0.0
        %1038 = vmatmul.mubr.f32.gmra.mxu0 %v893
        %v1039 = vpop.f32.mrf.mxu0
        %v1040 = vadd.f32 0.0, %v1039
        %v1041 = vpop.f32.mrf.mxu0
        %1042 = vmatprep.mubr.f32.mxu0 0.0
        %1043 = vmatmul.mubr.f32.gmra.mxu0 %v896
        %v1044 = vpop.f32.mrf.mxu0
        %v1045 = vadd.f32 0.0, %v1044
        %v1046 = vpop.f32.mrf.mxu0
        %1047 = vdwg.mxu0
        %v1048 = vmax.f32 %v965, %v1040
        %v1049 = vmax.f32 %v970, %v1045
        %vm1050 = vcmask 392192
        %1051 = vst.msk [vmem:[#allocation3] sm:$0xff] %vm1050, %v1048
        %vm1052 = vcmask 388096
        %1053 = vst.msk [vmem:[#allocation3 + $0x8] sm:$0xf] %vm1052, %v1049
        %v1054 = vld [vmem:[#allocation3] sm:$0xff]
        %1055 = vst.msk [vmem:[#allocation4] sm:$0xff] %vm466, %v1054
        %v1056 = vld [vmem:[#allocation3 + $0x1] sm:$0xff]
        %1058 = vrot.lane.b32.xlu0 %v1056, 12
        %v1059 = vpop.permute.xlu0 %1058
        %vm1061 = vcmask 195680
        %1062 = vst.msk [vmem:[#allocation4] sm:$0xff] %vm1061, %v1059
        %v1063 = vld [vmem:[#allocation3 + $0x2] sm:$0xff]
        %1065 = vrot.lane.b32.xlu0 %v1063, 24
        %v1066 = vpop.permute.xlu0 %1065
        %vm1068 = vcmask 294080
        %1069 = vst.msk [vmem:[#allocation4] sm:$0xff] %vm1068, %v1066
        %v1070 = vld [vmem:[#allocation3 + $0x3] sm:$0xff]
        %1072 = vrot.lane.b32.xlu0 %v1070, 36
        %v1073 = vpop.permute.xlu0 %1072
        %vm1075 = vcmask 392480
        %1076 = vst.msk [vmem:[#allocation4] sm:$0xff] %vm1075, %v1073
        %v1077 = vld [vmem:[#allocation3 + $0x4] sm:$0xff]
        %1079 = vrot.lane.b32.xlu0 %v1077, 48
        %v1080 = vpop.permute.xlu0 %1079
        %vm1082 = vcmask 490880
        %1083 = vst.msk [vmem:[#allocation4] sm:$0xff] %vm1082, %v1080
        %v1084 = vld [vmem:[#allocation3] sm:$0xff]
        %1086 = vrot.lane.b32.xlu0 %v1084, 48
        %v1087 = vpop.permute.xlu0 %1086
        %vm1089 = vcmask 589280
        %1090 = vst.msk [vmem:[#allocation4] sm:$0xff] %vm1089, %v1087
        %v1091 = vld [vmem:[#allocation3 + $0x1] sm:$0xff]
        %1093 = vrot.lane.b32.xlu0 %v1091, 60
        %v1094 = vpop.permute.xlu0 %1093
        %vm1096 = vcmask 687680
        %1097 = vst.msk [vmem:[#allocation4] sm:$0xff] %vm1096, %v1094
        %v1098 = vld [vmem:[#allocation3 + $0x2] sm:$0xff]
        %1100 = vrot.lane.b32.xlu0 %v1098, 72
        %v1101 = vpop.permute.xlu0 %1100
        %vm1103 = vcmask 786080
        %1104 = vst.msk [vmem:[#allocation4] sm:$0xff] %vm1103, %v1101
        %v1105 = vld [vmem:[#allocation3 + $0x3] sm:$0xff]
        %1107 = vrot.lane.b32.xlu0 %v1105, 84
        %v1108 = vpop.permute.xlu0 %1107
        %vm1110 = vcmask 884480
        %1111 = vst.msk [vmem:[#allocation4] sm:$0xff] %vm1110, %v1108
        %v1112 = vld [vmem:[#allocation3 + $0x4] sm:$0xff]
        %1114 = vrot.lane.b32.xlu0 %v1112, 96
        %v1115 = vpop.permute.xlu0 %1114
        %vm1117 = vcmask 982880
        %1118 = vst.msk [vmem:[#allocation4] sm:$0xff] %vm1117, %v1115
        %v1119 = vld [vmem:[#allocation3] sm:$0xff]
        %1121 = vrot.lane.b32.xlu0 %v1119, 96
        %v1122 = vpop.permute.xlu0 %1121
        %vm1124 = vcmask 1048512
        %1125 = vst.msk [vmem:[#allocation4] sm:$0xff] %vm1124, %v1122
        %vm1126 = vcmask 31744
        %1127 = vst.msk [vmem:[#allocation4 + $0x8] sm:$0xff] %vm1126, %v1122
        %v1128 = vld [vmem:[#allocation3 + $0x1] sm:$0xff]
        %1130 = vrot.lane.b32.xlu0 %v1128, 108
        %v1131 = vpop.permute.xlu0 %1130
        %vm1133 = vcmask 130080
        %1134 = vst.msk [vmem:[#allocation4 + $0x8] sm:$0xff] %vm1133, %v1131
        %v1135 = vld [vmem:[#allocation3 + $0x2] sm:$0xff]
        %1137 = vrot.lane.b32.xlu0 %v1135, 120
        %v1138 = vpop.permute.xlu0 %1137
        %vm1140 = vcmask 228480
        %1141 = vst.msk [vmem:[#allocation4 + $0x8] sm:$0xff] %vm1140, %v1138
        %v1142 = vld [vmem:[#allocation3 + $0x3] sm:$0xff]
        %1144 = vrot.lane.b32.xlu0 %v1142, 4
        %v1145 = vpop.permute.xlu0 %1144
        %vm1147 = vcmask 326880
        %1148 = vst.msk [vmem:[#allocation4 + $0x8] sm:$0xff] %vm1147, %v1145
        %v1149 = vld [vmem:[#allocation3 + $0x4] sm:$0xff]
        %1151 = vrot.lane.b32.xlu0 %v1149, 16
        %v1152 = vpop.permute.xlu0 %1151
        %vm1154 = vcmask 425280
        %1155 = vst.msk [vmem:[#allocation4 + $0x8] sm:$0xff] %vm1154, %v1152
        %v1156 = vld [vmem:[#allocation3] sm:$0xff]
        %1158 = vrot.lane.b32.xlu0 %v1156, 16
        %v1159 = vpop.permute.xlu0 %1158
        %vm1161 = vcmask 523680
        %1162 = vst.msk [vmem:[#allocation4 + $0x8] sm:$0xff] %vm1161, %v1159
        %v1163 = vld [vmem:[#allocation3 + $0x1] sm:$0xff]
        %1165 = vrot.lane.b32.xlu0 %v1163, 28
        %v1166 = vpop.permute.xlu0 %1165
        %vm1168 = vcmask 622080
        %1169 = vst.msk [vmem:[#allocation4 + $0x8] sm:$0xff] %vm1168, %v1166
        %v1170 = vld [vmem:[#allocation3 + $0x2] sm:$0xff]
        %1172 = vrot.lane.b32.xlu0 %v1170, 40
        %v1173 = vpop.permute.xlu0 %1172
        %vm1175 = vcmask 720480
        %1176 = vst.msk [vmem:[#allocation4 + $0x8] sm:$0xff] %vm1175, %v1173
        %v1177 = vld [vmem:[#allocation3 + $0x3] sm:$0xff]
        %1179 = vrot.lane.b32.xlu0 %v1177, 52
        %v1180 = vpop.permute.xlu0 %1179
        %vm1182 = vcmask 818880
        %1183 = vst.msk [vmem:[#allocation4 + $0x8] sm:$0xff] %vm1182, %v1180
        %v1184 = vld [vmem:[#allocation3 + $0x4] sm:$0xff]
        %1186 = vrot.lane.b32.xlu0 %v1184, 64
        %v1187 = vpop.permute.xlu0 %1186
        %vm1189 = vcmask 917280
        %1190 = vst.msk [vmem:[#allocation4 + $0x8] sm:$0xff] %vm1189, %v1187
        %v1191 = vld [vmem:[#allocation4] sm:$0xff]
        %v1192 = vld [vmem:[#allocation4 + $0x8] sm:$0xff]
        %v1193 = vpack.c.bf16 %v1191, %v1191
        %v1194 = vpack.c.bf16 %v1192, %v1192
        %v1195 = vld [vmem:[%s3] sm:$0xf]
        %v1196 = vld [vmem:[%s3 + $0x4] sm:$0xf]
        %v1197 = vld [vmem:[%s3 + $0x8] sm:$0xf]
        %v1198 = vld [vmem:[%s3 + $0xc] sm:$0xf]
        %v1199 = vld [vmem:[%s3 + $0x10] sm:$0xf]
        %v1200 = vld [vmem:[%s3 + $0x14] sm:$0xf]
        %v1201 = vld [vmem:[%s3 + $0x18] sm:$0xf]
        %v1202 = vld [vmem:[%s3 + $0x1c] sm:$0xf]
        %v1203 = vld [vmem:[%s3 + $0x20] sm:$0xf]
        %v1204 = vld [vmem:[%s3 + $0x24] sm:$0xf]
        %v1205 = vld [vmem:[%s3 + $0x28] sm:$0xf]
        %v1206 = vld [vmem:[%s3 + $0x2c] sm:$0xf]
        %v1207 = vld [vmem:[%s3 + $0x30] sm:$0xf]
        %v1208 = vld [vmem:[%s3 + $0x34] sm:$0xf]
        %v1209 = vld [vmem:[%s3 + $0x38] sm:$0xf]
        %v1210 = vld [vmem:[%s3 + $0x3c] sm:$0xf]
        %v1211 = vld [vmem:[%s3 + $0x40] sm:$0xf]
        %v1212 = vld [vmem:[%s3 + $0x44] sm:$0xf]
        %v1213 = vld [vmem:[%s3 + $0x48] sm:$0xf]
        %v1214 = vld [vmem:[%s3 + $0x4c] sm:$0xf]
        %v1215 = vld [vmem:[%s3 + $0x50] sm:$0xf]
        %v1216 = vld [vmem:[%s3 + $0x54] sm:$0xf]
        %v1217 = vld [vmem:[%s3 + $0x58] sm:$0xf]
        %v1218 = vld [vmem:[%s3 + $0x5c] sm:$0xf]
        %v1219 = vld [vmem:[%s3 + $0x60] sm:$0xf]
        %v1220 = vld [vmem:[%s3 + $0x64] sm:$0xf]
        %v1221 = vld [vmem:[%s3 + $0x68] sm:$0xf]
        %v1222 = vld [vmem:[%s3 + $0x6c] sm:$0xf]
        %v1223 = vld [vmem:[%s3 + $0x70] sm:$0xf]
        %v1224 = vld [vmem:[%s3 + $0x74] sm:$0xf]
        %v1225 = vld [vmem:[%s4] sm:$0x1]
        %v1227 = vlaneseq
        %v1228 = vshrl.u32 %v1227, 7
        %v1229 = vsub.s32 0, %v1228
        %v1230 = vrot.slane %v1225, %v1229
        %v1262 = vunpack.c.l.b16 %v1195
        %v1263 = vunpack.c.l.b16 %v1196
        %v1264 = vunpack.c.l.b16 %v1197
        %v1265 = vunpack.c.l.b16 %v1198
        %v1266 = vunpack.c.l.b16 %v1199
        %v1267 = vunpack.c.l.b16 %v1200
        %v1268 = vunpack.c.l.b16 %v1201
        %v1269 = vunpack.c.l.b16 %v1202
        %v1270 = vunpack.c.l.b16 %v1203
        %v1271 = vunpack.c.l.b16 %v1204
        %v1272 = vunpack.c.l.b16 %v1205
        %v1273 = vunpack.c.l.b16 %v1206
        %v1274 = vunpack.c.l.b16 %v1207
        %v1275 = vunpack.c.l.b16 %v1208
        %v1276 = vunpack.c.l.b16 %v1209
        %v1277 = vunpack.c.l.b16 %v1210
        %v1278 = vunpack.c.l.b16 %v1211
        %v1279 = vunpack.c.l.b16 %v1212
        %v1280 = vunpack.c.l.b16 %v1213
        %v1281 = vunpack.c.l.b16 %v1214
        %v1282 = vunpack.c.l.b16 %v1215
        %v1283 = vunpack.c.l.b16 %v1216
        %v1284 = vunpack.c.l.b16 %v1217
        %v1285 = vunpack.c.l.b16 %v1218
        %v1286 = vunpack.c.l.b16 %v1219
        %v1287 = vunpack.c.l.b16 %v1220
        %v1288 = vunpack.c.l.b16 %v1221
        %v1289 = vunpack.c.l.b16 %v1222
        %v1290 = vunpack.c.l.b16 %v1223
        %v1291 = vunpack.c.l.b16 %v1224
        %v1292 = vpack.c.b16 %v1263, %v1262
        %v1293 = vpack.c.b16 %v1265, %v1264
        %v1294 = vpack.c.b16 %v1267, %v1266
        %v1295 = vpack.c.b16 %v1269, %v1268
        %v1296 = vpack.c.b16 %v1271, %v1270
        %v1297 = vpack.c.b16 %v1273, %v1272
        %v1298 = vpack.c.b16 %v1275, %v1274
        %v1299 = vpack.c.b16 %v1277, %v1276
        %v1300 = vpack.c.b16 %v1279, %v1278
        %v1301 = vpack.c.b16 %v1281, %v1280
        %v1302 = vpack.c.b16 %v1283, %v1282
        %v1303 = vpack.c.b16 %v1285, %v1284
        %v1304 = vpack.c.b16 %v1287, %v1286
        %v1305 = vpack.c.b16 %v1289, %v1288
        %v1306 = vpack.c.b16 %v1291, %v1290
        %vm1322 = vcmask 916480
        %v1324 = vsel %vm1322, %v1194, 0
        %1326 = vmatprep.subr.bf16.mxu0 0
        %1327 = vmatpush1.bf16.msra.mxu0 %v1299
        %1328 = vmatprep.subr.bf16.mxu0 0
        %1329 = vmatpush1.bf16.msra.mxu0 %v1298
        %1330 = vmatprep.subr.bf16.mxu0 0
        %1331 = vmatpush1.bf16.msra.mxu0 %v1297
        %1332 = vmatprep.subr.bf16.mxu0 0
        %1333 = vmatpush1.bf16.msra.mxu0 %v1296
        %1334 = vmatprep.subr.bf16.mxu0 0
        %1335 = vmatpush1.bf16.msra.mxu0 %v1295
        %1336 = vmatprep.subr.bf16.mxu0 0
        %1337 = vmatpush1.bf16.msra.mxu0 %v1294
        %1338 = vmatprep.subr.bf16.mxu0 0
        %1339 = vmatpush1.bf16.msra.mxu0 %v1293
        %1340 = vmatprep.subr.bf16.mxu0 0
        %1341 = vmatpush1.bf16.msra.mxu0 %v1292
        %1342 = vmatprep.subr.bf16.mxu0 0
        %1343 = vmatpush2.bf16.msra.mxu0 0
        %1344 = vmatprep.subr.bf16.mxu0 0
        %1345 = vmatpush2.bf16.msra.mxu0 %v1306
        %1346 = vmatprep.subr.bf16.mxu0 0
        %1347 = vmatpush2.bf16.msra.mxu0 %v1305
        %1348 = vmatprep.subr.bf16.mxu0 0
        %1349 = vmatpush2.bf16.msra.mxu0 %v1304
        %1350 = vmatprep.subr.bf16.mxu0 0
        %1351 = vmatpush2.bf16.msra.mxu0 %v1303
        %1352 = vmatprep.subr.bf16.mxu0 0
        %1353 = vmatpush2.bf16.msra.mxu0 %v1302
        %1354 = vmatprep.subr.bf16.mxu0 0
        %1355 = vmatpush2.bf16.msra.mxu0 %v1301
        %1356 = vmatprep.subr.bf16.mxu0 0
        %1357 = vmatpush2.bf16.msra.mxu0 %v1300
        %1358 = vmatprep.mubr.bf16.mxu0 %v1324
        %1359 = vmatmul.mubr.bf16.gmra.mxu0 %v1193
        %v1360 = vpop.f32.mrf.mxu0
        %v1361 = vadd.f32 %v1230, %v1360
        %v1362 = vpop.f32.mrf.mxu0
        %v1363 = vpop.f32.mrf.mxu0
        %v1364 = vpop.f32.mrf.mxu0
        %1365 = vdwg.mxu0
        %v1366 = vmax.f32 %v1361, 0.0
        %vm1367 = vcmask 64512
        %v1368 = vsel %vm1367, %v632, 0
        %1370 = vmatprep.subr.mxu0 0.0
        %1371 = vmatpush1.msra.mxu0 0.0
        %1372 = vmatprep.subr.mxu0 0.0
        %1373 = vmatpush1.msra.mxu0 0.0
        %1374 = vmatprep.subr.mxu0 0.0
        %1375 = vmatpush1.msra.mxu0 0.0
        %1376 = vmatprep.subr.mxu0 0.0
        %1377 = vmatpush1.msra.mxu0 0.0
        %1378 = vmatprep.subr.mxu0 0.0
        %1379 = vmatpush1.msra.mxu0 0.0
        %1380 = vmatprep.subr.mxu0 0.0
        %1381 = vmatpush1.msra.mxu0 0.0
        %1382 = vmatprep.subr.mxu0 0.0
        %1383 = vmatpush1.msra.mxu0 0.0
        %1384 = vmatprep.subr.mxu0 0.0
        %1385 = vmatpush1.msra.mxu0 0.0
        %1386 = vmatprep.subr.mxu0 0.0
        %1387 = vmatpush1.msra.mxu0 0.0
        %1388 = vmatprep.subr.mxu0 0.0
        %1389 = vmatpush1.msra.mxu0 0.0
        %1390 = vmatprep.subr.mxu0 0.0
        %1391 = vmatpush1.msra.mxu0 0.0
        %1392 = vmatprep.subr.mxu0 0.0
        %1393 = vmatpush1.msra.mxu0 0.0
        %1394 = vmatprep.subr.mxu0 0.0
        %1395 = vmatpush1.msra.mxu0 0.0
        %1396 = vmatprep.subr.mxu0 0.0
        %1397 = vmatpush1.msra.mxu0 0.0
        %1398 = vmatprep.subr.mxu0 0.0
        %1399 = vmatpush1.msra.mxu0 0.0
        %1400 = vmatprep.subr.mxu0 0.0
        %1401 = vmatpush1.msra.mxu0 %v1366
        %1402 = vmatprep.subr.mxu0 0.0
        %1403 = vmatpush2.msra.mxu0 0.0
        %1404 = vmatprep.subr.mxu0 0.0
        %1405 = vmatpush2.msra.mxu0 0.0
        %1406 = vmatprep.subr.mxu0 0.0
        %1407 = vmatpush2.msra.mxu0 0.0
        %1408 = vmatprep.subr.mxu0 0.0
        %1409 = vmatpush2.msra.mxu0 0.0
        %1410 = vmatprep.subr.mxu0 0.0
        %1411 = vmatpush2.msra.mxu0 0.0
        %1412 = vmatprep.subr.mxu0 0.0
        %1413 = vmatpush2.msra.mxu0 0.0
        %1414 = vmatprep.subr.mxu0 0.0
        %1415 = vmatpush2.msra.mxu0 0.0
        %1416 = vmatprep.subr.mxu0 0.0
        %1417 = vmatpush2.msra.mxu0 0.0
        %1418 = vmatprep.subr.mxu0 0.0
        %1419 = vmatpush2.msra.mxu0 0.0
        %1420 = vmatprep.subr.mxu0 0.0
        %1421 = vmatpush2.msra.mxu0 0.0
        %1422 = vmatprep.subr.mxu0 0.0
        %1423 = vmatpush2.msra.mxu0 0.0
        %1424 = vmatprep.subr.mxu0 0.0
        %1425 = vmatpush2.msra.mxu0 0.0
        %1426 = vmatprep.subr.mxu0 0.0
        %1427 = vmatpush2.msra.mxu0 0.0
        %1428 = vmatprep.subr.mxu0 0.0
        %1429 = vmatpush2.msra.mxu0 0.0
        %1430 = vmatprep.subr.mxu0 0.0
        %1431 = vmatpush2.msra.mxu0 0.0
        %1432 = vmatprep.subr.mxu0 0.0
        %1433 = vmatpush2.msra.mxu0 0.0
        %1434 = vmatprep.mubr.f32.mxu0 0.0
        %1435 = vmatmul.mubr.f32.gmra.mxu0 %v1368
        %v1436 = vpop.f32.mrf.mxu0
        %v1437 = vadd.f32 0.0, %v1436
        %v1438 = vpop.f32.mrf.mxu0
        %1439 = vdwg.mxu0
        %v1440 = vsel %vm1367, %v640, 0
        %1442 = vmatprep.subr.mxu0 0.0
        %1443 = vmatpush1.msra.mxu0 0.0
        %1444 = vmatprep.subr.mxu0 0.0
        %1445 = vmatpush1.msra.mxu0 0.0
        %1446 = vmatprep.subr.mxu0 0.0
        %1447 = vmatpush1.msra.mxu0 0.0
        %1448 = vmatprep.subr.mxu0 0.0
        %1449 = vmatpush1.msra.mxu0 0.0
        %1450 = vmatprep.subr.mxu0 0.0
        %1451 = vmatpush1.msra.mxu0 0.0
        %1452 = vmatprep.subr.mxu0 0.0
        %1453 = vmatpush1.msra.mxu0 0.0
        %1454 = vmatprep.subr.mxu0 0.0
        %1455 = vmatpush1.msra.mxu0 0.0
        %1456 = vmatprep.subr.mxu0 0.0
        %1457 = vmatpush1.msra.mxu0 0.0
        %1458 = vmatprep.subr.mxu0 0.0
        %1459 = vmatpush1.msra.mxu0 0.0
        %1460 = vmatprep.subr.mxu0 0.0
        %1461 = vmatpush1.msra.mxu0 0.0
        %1462 = vmatprep.subr.mxu0 0.0
        %1463 = vmatpush1.msra.mxu0 0.0
        %1464 = vmatprep.subr.mxu0 0.0
        %1465 = vmatpush1.msra.mxu0 0.0
        %1466 = vmatprep.subr.mxu0 0.0
        %1467 = vmatpush1.msra.mxu0 0.0
        %1468 = vmatprep.subr.mxu0 0.0
        %1469 = vmatpush1.msra.mxu0 0.0
        %1470 = vmatprep.subr.mxu0 0.0
        %1471 = vmatpush1.msra.mxu0 0.0
        %1472 = vmatprep.subr.mxu0 0.0
        %1473 = vmatpush1.msra.mxu0 %v1366
        %1474 = vmatprep.subr.mxu0 0.0
        %1475 = vmatpush2.msra.mxu0 0.0
        %1476 = vmatprep.subr.mxu0 0.0
        %1477 = vmatpush2.msra.mxu0 0.0
        %1478 = vmatprep.subr.mxu0 0.0
        %1479 = vmatpush2.msra.mxu0 0.0
        %1480 = vmatprep.subr.mxu0 0.0
        %1481 = vmatpush2.msra.mxu0 0.0
        %1482 = vmatprep.subr.mxu0 0.0
        %1483 = vmatpush2.msra.mxu0 0.0
        %1484 = vmatprep.subr.mxu0 0.0
        %1485 = vmatpush2.msra.mxu0 0.0
        %1486 = vmatprep.subr.mxu0 0.0
        %1487 = vmatpush2.msra.mxu0 0.0
        %1488 = vmatprep.subr.mxu0 0.0
        %1489 = vmatpush2.msra.mxu0 0.0
        %1490 = vmatprep.subr.mxu0 0.0
        %1491 = vmatpush2.msra.mxu0 0.0
        %1492 = vmatprep.subr.mxu0 0.0
        %1493 = vmatpush2.msra.mxu0 0.0
        %1494 = vmatprep.subr.mxu0 0.0
        %1495 = vmatpush2.msra.mxu0 0.0
        %1496 = vmatprep.subr.mxu0 0.0
        %1497 = vmatpush2.msra.mxu0 0.0
        %1498 = vmatprep.subr.mxu0 0.0
        %1499 = vmatpush2.msra.mxu0 0.0
        %1500 = vmatprep.subr.mxu0 0.0
        %1501 = vmatpush2.msra.mxu0 0.0
        %1502 = vmatprep.subr.mxu0 0.0
        %1503 = vmatpush2.msra.mxu0 0.0
        %1504 = vmatprep.subr.mxu0 0.0
        %1505 = vmatpush2.msra.mxu0 0.0
        %1506 = vmatprep.mubr.f32.mxu0 0.0
        %1507 = vmatmul.mubr.f32.gmra.mxu0 %v1440
        %v1508 = vpop.f32.mrf.mxu0
        %v1509 = vadd.f32 0.0, %v1508
        %v1510 = vpop.f32.mrf.mxu0
        %1511 = vdwg.mxu0
        %v1512 = vmax.f32 %v1437, %v1509
        %vm1513 = vcmask 523264
        %v1515 = vsel %vm1513, %v1512, 0
        %1517 = vmatprep.subr.mxu0 0.0
        %1518 = vmatpush1.msra.mxu0 0.0
        %1519 = vmatprep.subr.mxu0 0.0
        %1520 = vmatpush1.msra.mxu0 0.0
        %1521 = vmatprep.subr.mxu0 0.0
        %1522 = vmatpush1.msra.mxu0 0.0
        %1523 = vmatprep.subr.mxu0 0.0
        %1524 = vmatpush1.msra.mxu0 0.0
        %1525 = vmatprep.subr.mxu0 0.0
        %1526 = vmatpush1.msra.mxu0 0.0
        %1527 = vmatprep.subr.mxu0 0.0
        %1528 = vmatpush1.msra.mxu0 0.0
        %1529 = vmatprep.subr.mxu0 0.0
        %1530 = vmatpush1.msra.mxu0 0.0
        %1531 = vmatprep.subr.mxu0 0.0
        %1532 = vmatpush1.msra.mxu0 0.0
        %1533 = vmatprep.subr.mxu0 0.0
        %1534 = vmatpush1.msra.mxu0 %v849
        %1535 = vmatprep.subr.mxu0 0.0
        %1536 = vmatpush1.msra.mxu0 %v848
        %1537 = vmatprep.subr.mxu0 0.0
        %1538 = vmatpush1.msra.mxu0 %v847
        %1539 = vmatprep.subr.mxu0 0.0
        %1540 = vmatpush1.msra.mxu0 %v846
        %1541 = vmatprep.subr.mxu0 0.0
        %1542 = vmatpush1.msra.mxu0 %v845
        %1543 = vmatprep.subr.mxu0 0.0
        %1544 = vmatpush1.msra.mxu0 %v844
        %1545 = vmatprep.subr.mxu0 0.0
        %1546 = vmatpush1.msra.mxu0 %v843
        %1547 = vmatprep.subr.mxu0 0.0
        %1548 = vmatpush1.msra.mxu0 %v842
        %1549 = vmatprep.subr.mxu0 0.0
        %1550 = vmatpush2.msra.mxu0 0.0
        %1551 = vmatprep.subr.mxu0 0.0
        %1552 = vmatpush2.msra.mxu0 0.0
        %1553 = vmatprep.subr.mxu0 0.0
        %1554 = vmatpush2.msra.mxu0 0.0
        %1555 = vmatprep.subr.mxu0 0.0
        %1556 = vmatpush2.msra.mxu0 0.0
        %1557 = vmatprep.subr.mxu0 0.0
        %1558 = vmatpush2.msra.mxu0 0.0
        %1559 = vmatprep.subr.mxu0 0.0
        %1560 = vmatpush2.msra.mxu0 0.0
        %1561 = vmatprep.subr.mxu0 0.0
        %1562 = vmatpush2.msra.mxu0 0.0
        %1563 = vmatprep.subr.mxu0 0.0
        %1564 = vmatpush2.msra.mxu0 0.0
        %1565 = vmatprep.subr.mxu0 0.0
        %1566 = vmatpush2.msra.mxu0 0.0
        %1567 = vmatprep.subr.mxu0 0.0
        %1568 = vmatpush2.msra.mxu0 0.0
        %1569 = vmatprep.subr.mxu0 0.0
        %1570 = vmatpush2.msra.mxu0 0.0
        %1571 = vmatprep.subr.mxu0 0.0
        %1572 = vmatpush2.msra.mxu0 0.0
        %1573 = vmatprep.subr.mxu0 0.0
        %1574 = vmatpush2.msra.mxu0 0.0
        %1575 = vmatprep.subr.mxu0 0.0
        %1576 = vmatpush2.msra.mxu0 0.0
        %1577 = vmatprep.subr.mxu0 0.0
        %1578 = vmatpush2.msra.mxu0 0.0
        %1579 = vmatprep.subr.mxu0 0.0
        %1580 = vmatpush2.msra.mxu0 0.0
        %1581 = vmatprep.mubr.f32.mxu0 0.0
        %1582 = vmatmul.mubr.f32.gmra.mxu0 %v1515
        %v1583 = vpop.f32.mrf.mxu0
        %v1584 = vadd.f32 0.0, %v1583
        %v1585 = vpop.f32.mrf.mxu0
        %1586 = vdwg.mxu0
        %1587 = vmatprep.subr.mxu0 0.0
        %1588 = vmatpush1.msra.mxu0 0.0
        %1589 = vmatprep.subr.mxu0 0.0
        %1590 = vmatpush1.msra.mxu0 0.0
        %1591 = vmatprep.subr.mxu0 0.0
        %1592 = vmatpush1.msra.mxu0 0.0
        %1593 = vmatprep.subr.mxu0 0.0
        %1594 = vmatpush1.msra.mxu0 0.0
        %1595 = vmatprep.subr.mxu0 0.0
        %1596 = vmatpush1.msra.mxu0 0.0
        %1597 = vmatprep.subr.mxu0 0.0
        %1598 = vmatpush1.msra.mxu0 0.0
        %1599 = vmatprep.subr.mxu0 0.0
        %1600 = vmatpush1.msra.mxu0 0.0
        %1601 = vmatprep.subr.mxu0 0.0
        %1602 = vmatpush1.msra.mxu0 0.0
        %1603 = vmatprep.subr.mxu0 0.0
        %1604 = vmatpush1.msra.mxu0 %v886
        %1605 = vmatprep.subr.mxu0 0.0
        %1606 = vmatpush1.msra.mxu0 %v885
        %1607 = vmatprep.subr.mxu0 0.0
        %1608 = vmatpush1.msra.mxu0 %v884
        %1609 = vmatprep.subr.mxu0 0.0
        %1610 = vmatpush1.msra.mxu0 %v883
        %1611 = vmatprep.subr.mxu0 0.0
        %1612 = vmatpush1.msra.mxu0 %v882
        %1613 = vmatprep.subr.mxu0 0.0
        %1614 = vmatpush1.msra.mxu0 %v881
        %1615 = vmatprep.subr.mxu0 0.0
        %1616 = vmatpush1.msra.mxu0 %v880
        %1617 = vmatprep.subr.mxu0 0.0
        %1618 = vmatpush1.msra.mxu0 %v879
        %1619 = vmatprep.subr.mxu0 0.0
        %1620 = vmatpush2.msra.mxu0 0.0
        %1621 = vmatprep.subr.mxu0 0.0
        %1622 = vmatpush2.msra.mxu0 0.0
        %1623 = vmatprep.subr.mxu0 0.0
        %1624 = vmatpush2.msra.mxu0 0.0
        %1625 = vmatprep.subr.mxu0 0.0
        %1626 = vmatpush2.msra.mxu0 0.0
        %1627 = vmatprep.subr.mxu0 0.0
        %1628 = vmatpush2.msra.mxu0 0.0
        %1629 = vmatprep.subr.mxu0 0.0
        %1630 = vmatpush2.msra.mxu0 0.0
        %1631 = vmatprep.subr.mxu0 0.0
        %1632 = vmatpush2.msra.mxu0 0.0
        %1633 = vmatprep.subr.mxu0 0.0
        %1634 = vmatpush2.msra.mxu0 0.0
        %1635 = vmatprep.subr.mxu0 0.0
        %1636 = vmatpush2.msra.mxu0 0.0
        %1637 = vmatprep.subr.mxu0 0.0
        %1638 = vmatpush2.msra.mxu0 0.0
        %1639 = vmatprep.subr.mxu0 0.0
        %1640 = vmatpush2.msra.mxu0 0.0
        %1641 = vmatprep.subr.mxu0 0.0
        %1642 = vmatpush2.msra.mxu0 0.0
        %1643 = vmatprep.subr.mxu0 0.0
        %1644 = vmatpush2.msra.mxu0 0.0
        %1645 = vmatprep.subr.mxu0 0.0
        %1646 = vmatpush2.msra.mxu0 0.0
        %1647 = vmatprep.subr.mxu0 0.0
        %1648 = vmatpush2.msra.mxu0 0.0
        %1649 = vmatprep.subr.mxu0 0.0
        %1650 = vmatpush2.msra.mxu0 0.0
        %1651 = vmatprep.mubr.f32.mxu0 0.0
        %1652 = vmatmul.mubr.f32.gmra.mxu0 %v1515
        %v1653 = vpop.f32.mrf.mxu0
        %v1654 = vadd.f32 0.0, %v1653
        %v1655 = vpop.f32.mrf.mxu0
        %1656 = vdwg.mxu0
        %v1657 = vmax.f32 %v1584, %v1654
        %vm1658 = vcmask 257024
        %1659 = vst.msk [vmem:[#allocation5] sm:$0xf] %vm1658, %v1657
        %v1660 = vld [vmem:[%s6] sm:$0x1]
        %v1661 = vld [vmem:[#allocation5] sm:$0x1]
        %v1662 = vpack.c.bf16 %v1661, %v1661
        %v1663 = vld [vmem:[%s5] sm:$0xf]
        %v1664 = vld [vmem:[%s5 + $0x4] sm:$0xf]
        %v1665 = vld [vmem:[%s5 + $0x8] sm:$0xf]
        %v1666 = vld [vmem:[%s5 + $0xc] sm:$0xf]
        %v1671 = vunpack.c.l.b16 %v1663
        %v1672 = vunpack.c.l.b16 %v1664
        %v1673 = vunpack.c.l.b16 %v1665
        %v1674 = vunpack.c.l.b16 %v1666
        %v1675 = vpack.c.b16 %v1672, %v1671
        %v1676 = vpack.c.b16 %v1674, %v1673
        %vm1679 = vcmask 261120
        %v1681 = vsel %vm1679, %v1662, 0
        %1683 = vmatprep.subr.bf16.mxu0 0
        %1684 = vmatpush1.bf16.msra.mxu0 0
        %1685 = vmatprep.subr.bf16.mxu0 0
        %1686 = vmatpush1.bf16.msra.mxu0 0
        %1687 = vmatprep.subr.bf16.mxu0 0
        %1688 = vmatpush1.bf16.msra.mxu0 0
        %1689 = vmatprep.subr.bf16.mxu0 0
        %1690 = vmatpush1.bf16.msra.mxu0 0
        %1691 = vmatprep.subr.bf16.mxu0 0
        %1692 = vmatpush1.bf16.msra.mxu0 0
        %1693 = vmatprep.subr.bf16.mxu0 0
        %1694 = vmatpush1.bf16.msra.mxu0 0
        %1695 = vmatprep.subr.bf16.mxu0 0
        %1696 = vmatpush1.bf16.msra.mxu0 %v1676
        %1697 = vmatprep.subr.bf16.mxu0 0
        %1698 = vmatpush1.bf16.msra.mxu0 %v1675
        %1699 = vmatprep.subr.bf16.mxu0 0
        %1700 = vmatpush2.bf16.msra.mxu0 0
        %1701 = vmatprep.subr.bf16.mxu0 0
        %1702 = vmatpush2.bf16.msra.mxu0 0
        %1703 = vmatprep.subr.bf16.mxu0 0
        %1704 = vmatpush2.bf16.msra.mxu0 0
        %1705 = vmatprep.subr.bf16.mxu0 0
        %1706 = vmatpush2.bf16.msra.mxu0 0
        %1707 = vmatprep.subr.bf16.mxu0 0
        %1708 = vmatpush2.bf16.msra.mxu0 0
        %1709 = vmatprep.subr.bf16.mxu0 0
        %1710 = vmatpush2.bf16.msra.mxu0 0
        %1711 = vmatprep.subr.bf16.mxu0 0
        %1712 = vmatpush2.bf16.msra.mxu0 0
        %1713 = vmatprep.subr.bf16.mxu0 0
        %1714 = vmatpush2.bf16.msra.mxu0 0
        %1715 = vmatprep.mubr.bf16.mxu0 0
        %1716 = vmatmul.mubr.bf16.gmra.mxu0 %v1681
        %v1717 = vpop.f32.mrf.mxu0
        %v1718 = vadd.f32 0.0, %v1717
        %v1719 = vpop.f32.mrf.mxu0
        %v1720 = vpop.f32.mrf.mxu0
        %v1721 = vpop.f32.mrf.mxu0
        %1722 = vdwg.mxu0
        %v1723 = vadd.f32 %v1660, %v1718
        %v1724 = vld [vmem:[#allocation5 + $0x1] sm:$0x1]
        %v1725 = vpack.c.bf16 %v1724, %v1724
        %s1726 = scalar_lea.vmem %s5, 16
        %v1727 = vld [vmem:[%s1726] sm:$0xf]
        %v1728 = vld [vmem:[%s1726 + $0x4] sm:$0xf]
        %v1729 = vld [vmem:[%s1726 + $0x8] sm:$0xf]
        %v1730 = vld [vmem:[%s1726 + $0xc] sm:$0xf]
        %v1735 = vunpack.c.l.b16 %v1727
        %v1736 = vunpack.c.l.b16 %v1728
        %v1737 = vunpack.c.l.b16 %v1729
        %v1738 = vunpack.c.l.b16 %v1730
        %v1739 = vpack.c.b16 %v1736, %v1735
        %v1740 = vpack.c.b16 %v1738, %v1737
        %v1744 = vsel %vm1679, %v1725, 0
        %1746 = vmatprep.subr.bf16.mxu0 0
        %1747 = vmatpush1.bf16.msra.mxu0 0
        %1748 = vmatprep.subr.bf16.mxu0 0
        %1749 = vmatpush1.bf16.msra.mxu0 0
        %1750 = vmatprep.subr.bf16.mxu0 0
        %1751 = vmatpush1.bf16.msra.mxu0 0
        %1752 = vmatprep.subr.bf16.mxu0 0
        %1753 = vmatpush1.bf16.msra.mxu0 0
        %1754 = vmatprep.subr.bf16.mxu0 0
        %1755 = vmatpush1.bf16.msra.mxu0 0
        %1756 = vmatprep.subr.bf16.mxu0 0
        %1757 = vmatpush1.bf16.msra.mxu0 0
        %1758 = vmatprep.subr.bf16.mxu0 0
        %1759 = vmatpush1.bf16.msra.mxu0 %v1740
        %1760 = vmatprep.subr.bf16.mxu0 0
        %1761 = vmatpush1.bf16.msra.mxu0 %v1739
        %1762 = vmatprep.subr.bf16.mxu0 0
        %1763 = vmatpush2.bf16.msra.mxu0 0
        %1764 = vmatprep.subr.bf16.mxu0 0
        %1765 = vmatpush2.bf16.msra.mxu0 0
        %1766 = vmatprep.subr.bf16.mxu0 0
        %1767 = vmatpush2.bf16.msra.mxu0 0
        %1768 = vmatprep.subr.bf16.mxu0 0
        %1769 = vmatpush2.bf16.msra.mxu0 0
        %1770 = vmatprep.subr.bf16.mxu0 0
        %1771 = vmatpush2.bf16.msra.mxu0 0
        %1772 = vmatprep.subr.bf16.mxu0 0
        %1773 = vmatpush2.bf16.msra.mxu0 0
        %1774 = vmatprep.subr.bf16.mxu0 0
        %1775 = vmatpush2.bf16.msra.mxu0 0
        %1776 = vmatprep.subr.bf16.mxu0 0
        %1777 = vmatpush2.bf16.msra.mxu0 0
        %1778 = vmatprep.mubr.bf16.mxu0 0
        %1779 = vmatmul.mubr.bf16.gmra.mxu0 %v1744
        %v1780 = vpop.f32.mrf.mxu0
        %v1781 = vadd.f32 0.0, %v1780
        %v1782 = vpop.f32.mrf.mxu0
        %v1783 = vpop.f32.mrf.mxu0
        %v1784 = vpop.f32.mrf.mxu0
        %1785 = vdwg.mxu0
        %v1786 = vadd.f32 %v1723, %v1781
        %v1787 = vld [vmem:[#allocation5 + $0x2] sm:$0x1]
        %v1788 = vpack.c.bf16 %v1787, %v1787
        %s1789 = scalar_lea.vmem %s5, 32
        %v1790 = vld [vmem:[%s1789] sm:$0xf]
        %v1791 = vld [vmem:[%s1789 + $0x4] sm:$0xf]
        %v1792 = vld [vmem:[%s1789 + $0x8] sm:$0xf]
        %v1793 = vld [vmem:[%s1789 + $0xc] sm:$0xf]
        %v1798 = vunpack.c.l.b16 %v1790
        %v1799 = vunpack.c.l.b16 %v1791
        %v1800 = vunpack.c.l.b16 %v1792
        %v1801 = vunpack.c.l.b16 %v1793
        %v1802 = vpack.c.b16 %v1799, %v1798
        %v1803 = vpack.c.b16 %v1801, %v1800
        %v1807 = vsel %vm1679, %v1788, 0
        %1809 = vmatprep.subr.bf16.mxu0 0
        %1810 = vmatpush1.bf16.msra.mxu0 0
        %1811 = vmatprep.subr.bf16.mxu0 0
        %1812 = vmatpush1.bf16.msra.mxu0 0
        %1813 = vmatprep.subr.bf16.mxu0 0
        %1814 = vmatpush1.bf16.msra.mxu0 0
        %1815 = vmatprep.subr.bf16.mxu0 0
        %1816 = vmatpush1.bf16.msra.mxu0 0
        %1817 = vmatprep.subr.bf16.mxu0 0
        %1818 = vmatpush1.bf16.msra.mxu0 0
        %1819 = vmatprep.subr.bf16.mxu0 0
        %1820 = vmatpush1.bf16.msra.mxu0 0
        %1821 = vmatprep.subr.bf16.mxu0 0
        %1822 = vmatpush1.bf16.msra.mxu0 %v1803
        %1823 = vmatprep.subr.bf16.mxu0 0
        %1824 = vmatpush1.bf16.msra.mxu0 %v1802
        %1825 = vmatprep.subr.bf16.mxu0 0
        %1826 = vmatpush2.bf16.msra.mxu0 0
        %1827 = vmatprep.subr.bf16.mxu0 0
        %1828 = vmatpush2.bf16.msra.mxu0 0
        %1829 = vmatprep.subr.bf16.mxu0 0
        %1830 = vmatpush2.bf16.msra.mxu0 0
        %1831 = vmatprep.subr.bf16.mxu0 0
        %1832 = vmatpush2.bf16.msra.mxu0 0
        %1833 = vmatprep.subr.bf16.mxu0 0
        %1834 = vmatpush2.bf16.msra.mxu0 0
        %1835 = vmatprep.subr.bf16.mxu0 0
        %1836 = vmatpush2.bf16.msra.mxu0 0
        %1837 = vmatprep.subr.bf16.mxu0 0
        %1838 = vmatpush2.bf16.msra.mxu0 0
        %1839 = vmatprep.subr.bf16.mxu0 0
        %1840 = vmatpush2.bf16.msra.mxu0 0
        %1841 = vmatprep.mubr.bf16.mxu0 0
        %1842 = vmatmul.mubr.bf16.gmra.mxu0 %v1807
        %v1843 = vpop.f32.mrf.mxu0
        %v1844 = vadd.f32 0.0, %v1843
        %v1845 = vpop.f32.mrf.mxu0
        %v1846 = vpop.f32.mrf.mxu0
        %v1847 = vpop.f32.mrf.mxu0
        %1848 = vdwg.mxu0
        %v1849 = vadd.f32 %v1786, %v1844
        %v1850 = vld [vmem:[#allocation5 + $0x3] sm:$0x1]
        %v1851 = vpack.c.bf16 %v1850, %v1850
        %s1852 = scalar_lea.vmem %s5, 48
        %v1853 = vld [vmem:[%s1852] sm:$0xf]
        %v1854 = vld [vmem:[%s1852 + $0x4] sm:$0xf]
        %v1855 = vld [vmem:[%s1852 + $0x8] sm:$0xf]
        %v1856 = vld [vmem:[%s1852 + $0xc] sm:$0xf]
        %v1861 = vunpack.c.l.b16 %v1853
        %v1862 = vunpack.c.l.b16 %v1854
        %v1863 = vunpack.c.l.b16 %v1855
        %v1864 = vunpack.c.l.b16 %v1856
        %v1865 = vpack.c.b16 %v1862, %v1861
        %v1866 = vpack.c.b16 %v1864, %v1863
        %v1870 = vsel %vm1679, %v1851, 0
        %1872 = vmatprep.subr.bf16.mxu0 0
        %1873 = vmatpush1.bf16.msra.mxu0 0
        %1874 = vmatprep.subr.bf16.mxu0 0
        %1875 = vmatpush1.bf16.msra.mxu0 0
        %1876 = vmatprep.subr.bf16.mxu0 0
        %1877 = vmatpush1.bf16.msra.mxu0 0
        %1878 = vmatprep.subr.bf16.mxu0 0
        %1879 = vmatpush1.bf16.msra.mxu0 0
        %1880 = vmatprep.subr.bf16.mxu0 0
        %1881 = vmatpush1.bf16.msra.mxu0 0
        %1882 = vmatprep.subr.bf16.mxu0 0
        %1883 = vmatpush1.bf16.msra.mxu0 0
        %1884 = vmatprep.subr.bf16.mxu0 0
        %1885 = vmatpush1.bf16.msra.mxu0 %v1866
        %1886 = vmatprep.subr.bf16.mxu0 0
        %1887 = vmatpush1.bf16.msra.mxu0 %v1865
        %1888 = vmatprep.subr.bf16.mxu0 0
        %1889 = vmatpush2.bf16.msra.mxu0 0
        %1890 = vmatprep.subr.bf16.mxu0 0
        %1891 = vmatpush2.bf16.msra.mxu0 0
        %1892 = vmatprep.subr.bf16.mxu0 0
        %1893 = vmatpush2.bf16.msra.mxu0 0
        %1894 = vmatprep.subr.bf16.mxu0 0
        %1895 = vmatpush2.bf16.msra.mxu0 0
        %1896 = vmatprep.subr.bf16.mxu0 0
        %1897 = vmatpush2.bf16.msra.mxu0 0
        %1898 = vmatprep.subr.bf16.mxu0 0
        %1899 = vmatpush2.bf16.msra.mxu0 0
        %1900 = vmatprep.subr.bf16.mxu0 0
        %1901 = vmatpush2.bf16.msra.mxu0 0
        %1902 = vmatprep.subr.bf16.mxu0 0
        %1903 = vmatpush2.bf16.msra.mxu0 0
        %1904 = vmatprep.mubr.bf16.mxu0 0
        %1905 = vmatmul.mubr.bf16.gmra.mxu0 %v1870
        %v1906 = vpop.f32.mrf.mxu0
        %v1907 = vadd.f32 0.0, %v1906
        %v1908 = vpop.f32.mrf.mxu0
        %v1909 = vpop.f32.mrf.mxu0
        %v1910 = vpop.f32.mrf.mxu0
        %1911 = vdwg.mxu0
        %v1912 = vadd.f32 %v1849, %v1907
        %v1913 = vmax.f32 %v1912, 0.0
        %v1914 = vpack.c.bf16 %v1913, %v1913
        %v1915 = vld [vmem:[%s7] sm:$0xf]
        %v1916 = vld [vmem:[%s7 + $0x4] sm:$0xf]
        %v1917 = vld [vmem:[%s7 + $0x8] sm:$0xf]
        %v1918 = vld [vmem:[%s7 + $0xc] sm:$0xf]
        %v1919 = vld [vmem:[%s8] sm:$0x1]
        %v1924 = vunpack.c.l.b16 %v1915
        %v1925 = vunpack.c.l.b16 %v1916
        %v1926 = vunpack.c.l.b16 %v1917
        %v1927 = vunpack.c.l.b16 %v1918
        %v1928 = vpack.c.b16 %v1925, %v1924
        %v1929 = vpack.c.b16 %v1927, %v1926
        %v1933 = vsel %vm1679, %v1914, 0
        %1935 = vmatprep.subr.bf16.mxu0 0
        %1936 = vmatpush1.bf16.msra.mxu0 0
        %1937 = vmatprep.subr.bf16.mxu0 0
        %1938 = vmatpush1.bf16.msra.mxu0 0
        %1939 = vmatprep.subr.bf16.mxu0 0
        %1940 = vmatpush1.bf16.msra.mxu0 0
        %1941 = vmatprep.subr.bf16.mxu0 0
        %1942 = vmatpush1.bf16.msra.mxu0 0
        %1943 = vmatprep.subr.bf16.mxu0 0
        %1944 = vmatpush1.bf16.msra.mxu0 0
        %1945 = vmatprep.subr.bf16.mxu0 0
        %1946 = vmatpush1.bf16.msra.mxu0 0
        %1947 = vmatprep.subr.bf16.mxu0 0
        %1948 = vmatpush1.bf16.msra.mxu0 %v1929
        %1949 = vmatprep.subr.bf16.mxu0 0
        %1950 = vmatpush1.bf16.msra.mxu0 %v1928
        %1951 = vmatprep.subr.bf16.mxu0 0
        %1952 = vmatpush2.bf16.msra.mxu0 0
        %1953 = vmatprep.subr.bf16.mxu0 0
        %1954 = vmatpush2.bf16.msra.mxu0 0
        %1955 = vmatprep.subr.bf16.mxu0 0
        %1956 = vmatpush2.bf16.msra.mxu0 0
        %1957 = vmatprep.subr.bf16.mxu0 0
        %1958 = vmatpush2.bf16.msra.mxu0 0
        %1959 = vmatprep.subr.bf16.mxu0 0
        %1960 = vmatpush2.bf16.msra.mxu0 0
        %1961 = vmatprep.subr.bf16.mxu0 0
        %1962 = vmatpush2.bf16.msra.mxu0 0
        %1963 = vmatprep.subr.bf16.mxu0 0
        %1964 = vmatpush2.bf16.msra.mxu0 0
        %1965 = vmatprep.subr.bf16.mxu0 0
        %1966 = vmatpush2.bf16.msra.mxu0 0
        %1967 = vmatprep.mubr.bf16.mxu0 0
        %1968 = vmatmul.mubr.bf16.gmra.mxu0 %v1933
        %v1969 = vpop.f32.mrf.mxu0
        %v1970 = vadd.f32 %v1919, %v1969
        %v1971 = vpop.f32.mrf.mxu0
        %v1972 = vpop.f32.mrf.mxu0
        %v1973 = vpop.f32.mrf.mxu0
        %1974 = vdwg.mxu0
        %v1975 = vmax.f32 %v1970, 0.0
        %v1976 = vpack.c.bf16 %v1975, %v1975
        %v1977 = vld [vmem:[%s9] sm:$0xf]
        %v1978 = vld [vmem:[%s9 + $0x4] sm:$0xf]
        %v1979 = vld [vmem:[%s10] sm:$0x1]
        %v1982 = vunpack.c.l.b16 %v1977
        %v1983 = vunpack.c.l.b16 %v1978
        %v1984 = vpack.c.b16 %v1983, %v1982
        %vm1986 = vcmask 130048
        %v1988 = vsel %vm1986, %v1976, 0
        %1990 = vmatprep.subr.bf16.mxu0 0
        %1991 = vmatpush1.bf16.msra.mxu0 0
        %1992 = vmatprep.subr.bf16.mxu0 0
        %1993 = vmatpush1.bf16.msra.mxu0 0
        %1994 = vmatprep.subr.bf16.mxu0 0
        %1995 = vmatpush1.bf16.msra.mxu0 0
        %1996 = vmatprep.subr.bf16.mxu0 0
        %1997 = vmatpush1.bf16.msra.mxu0 0
        %1998 = vmatprep.subr.bf16.mxu0 0
        %1999 = vmatpush1.bf16.msra.mxu0 0
        %2000 = vmatprep.subr.bf16.mxu0 0
        %2001 = vmatpush1.bf16.msra.mxu0 0
        %2002 = vmatprep.subr.bf16.mxu0 0
        %2003 = vmatpush1.bf16.msra.mxu0 0
        %2004 = vmatprep.subr.bf16.mxu0 0
        %2005 = vmatpush1.bf16.msra.mxu0 %v1984
        %2006 = vmatprep.subr.bf16.mxu0 0
        %2007 = vmatpush2.bf16.msra.mxu0 0
        %2008 = vmatprep.subr.bf16.mxu0 0
        %2009 = vmatpush2.bf16.msra.mxu0 0
        %2010 = vmatprep.subr.bf16.mxu0 0
        %2011 = vmatpush2.bf16.msra.mxu0 0
        %2012 = vmatprep.subr.bf16.mxu0 0
        %2013 = vmatpush2.bf16.msra.mxu0 0
        %2014 = vmatprep.subr.bf16.mxu0 0
        %2015 = vmatpush2.bf16.msra.mxu0 0
        %2016 = vmatprep.subr.bf16.mxu0 0
        %2017 = vmatpush2.bf16.msra.mxu0 0
        %2018 = vmatprep.subr.bf16.mxu0 0
        %2019 = vmatpush2.bf16.msra.mxu0 0
        %2020 = vmatprep.subr.bf16.mxu0 0
        %2021 = vmatpush2.bf16.msra.mxu0 0
        %2022 = vmatprep.mubr.bf16.mxu0 0
        %2023 = vmatmul.mubr.bf16.gmra.mxu0 %v1988
        %v2024 = vpop.f32.mrf.mxu0
        %v2025 = vadd.f32 %v1979, %v2024
        %v2026 = vpop.f32.mrf.mxu0
        %v2027 = vpop.f32.mrf.mxu0
        %v2028 = vpop.f32.mrf.mxu0
        %2029 = vdwg.mxu0
        %vm2030 = vcmask 73728
        %2031 = vst.msk [vmem:[%s378] sm:$0x1] %vm2030, %v2025
        %s2032 = sand.u32 %s269, 1
        %s2033 = scalar_lea.sflag [#allocation7], %s2032
        %s2034 = sand.u32 %s269, 1
        %s2035 = scalar_lea.vmem [#allocation6], %s2034
        // Predicated region
        $region65: #{net_forward.1} parent=63 // pred_check
          %p2036 = pneg %p279
        $region66: #{net_forward.1} parent=63 // pred_check_branch
          %2038 = sbr.rel (%p2036) target = $region68
        $region67: #{net_forward.1} parent=63 // pred_region
          %s2040 = ssub.s32 16, 16
          %2041 = vsyncadd %s2033, %s2040
          %s2042 = smul.addr %s25, 16
          %s2043 = scalar_lea.hbm %s11, %s2042
          %s2045 = sshll.u32 %s2035, 4
          %s2046 = int_to_ptr.vmem [resolvable:$true] %s2045
          %2048 = dma.vmem_to_hbm [thread:$0]  %s2046, 16, %s2043, %s2033
        $region68: #{net_forward.1} parent=63 // pred_fallthru
          _
      $region64: #{net_forward.1} parent=5 // pred_fallthru
        _
      %p2049 = scmp.le.s32.totalorder 2, %s20
      // Predicated region
      $region69: #{net_forward.1} parent=5 // pred_check
        %p2050 = pneg %p2049
      $region70: #{net_forward.1} parent=5 // pred_check_branch
        %2052 = sbr.rel (%p2050) target = $region72
      $region71: #{net_forward.1} parent=5 // pred_region
        %s2053 = ssub.s32 %s20, 2
        // Predicated region
        $region73: #{net_forward.1} parent=71 // pred_check
          %p2054 = pneg %p285
        $region74: #{net_forward.1} parent=71 // pred_check_branch
          %2056 = sbr.rel (%p2054) target = $region76
        $region75: #{net_forward.1} parent=71 // pred_region
          %s2057 = sand.u32 %s270, 1
          %s2058 = scalar_lea.sflag [#allocation7], %s2057
          %s2059 = sand.u32 %s270, 1
          %s2060 = scalar_lea.vmem [#allocation6], %s2059
          %2061 = dma.done %s2058, 16
        $region76: #{net_forward.1} parent=71 // pred_fallthru
          _
      $region72: #{net_forward.1} parent=5 // pred_fallthru
        _
    $region6: #{net_forward.1} parent=1 // loop_footer
      %s24 = sadd.s32 1, %s20
    $region7: #{net_forward.1} parent=1 // loop_footer_branch
      %19 = sbr.rel target = $region3
    $region8: #{net_forward.1} parent=1 // loop_exit
      _
    %2062 = vsyncpa [#allocation7], 1
    %s2063 = scalar_lea.sflag [#allocation7], 1
    %2064 = vsyncpa %s2063, 1

</llo_original>
